<compile_context>
chip_gen: v7x
topology: tpu7x:2x2x1
jax: 0.10.0
libtpu: 0.0.40
codegen_flags: <defaults>
</compile_context>

<pallas_src>
import functools

import jax
import jax.numpy as jnp
import numpy as np
from jax import lax
from jax.experimental import pallas as pl
from jax.experimental.pallas import tpu as pltpu

BN_EPS = 1e-5


# ----------------------------------------------------------------------------
# 3x3 "same" conv (bias-free, im2col + single bf16 MXU matmul) with fused
# per-channel BN partial statistics; optionally fuses the *previous* layer's
# BN affine + ReLU onto the input (used for conv2, so BN1 output never hits HBM
# as a separate pass).  One batch element per grid step.
# ----------------------------------------------------------------------------
def _conv3x3_kernel(*refs, fuse_bn_relu):
    if fuse_bn_relu:
        x_ref, scale_ref, shift_ref, w_ref, y_ref, stats_ref = refs
    else:
        x_ref, w_ref, y_ref, stats_ref = refs

    _, H, W, Cin = x_ref.shape
    Cout = y_ref.shape[-1]

    x = x_ref[0]                                          # (H, W, Cin) f32
    if fuse_bn_relu:
        # previous layer's BatchNorm (affine form) + ReLU, in f32
        x = jnp.maximum(x * scale_ref[...] + shift_ref[...], 0.0)
    x = x.astype(jnp.bfloat16)                            # MXU operands in bf16

    # Zero halo built in VMEM/registers (no padded HBM copy + re-read).
    zrow = jnp.zeros((1, W, Cin), jnp.bfloat16)
    zcol = jnp.zeros((H + 2, 1, Cin), jnp.bfloat16)
    xp = jnp.concatenate([zrow, x, zrow], axis=0)         # (H+2, W,   Cin)
    xp = jnp.concatenate([zcol, xp, zcol], axis=1)        # (H+2, W+2, Cin)

    # im2col: one (H*W, 9*Cin) x (9*Cin, Cout) matmul, f32 accumulation.
    taps = [xp[dy:dy + H, dx:dx + W, :] for dy in range(3) for dx in range(3)]
    patches = jnp.concatenate(taps, axis=-1).reshape(H * W, 9 * Cin)
    acc = jnp.dot(patches, w_ref[...], preferred_element_type=jnp.float32)

    y_ref[...] = acc.reshape(1, H, W, Cout)

    # Per-channel partial BN statistics, accumulated over the batch grid axis.
    s = jnp.sum(acc, axis=0, keepdims=True)               # (1, Cout) sum
    ss = jnp.sum(acc * acc, axis=0, keepdims=True)        # (1, Cout) sum of squares

    @pl.when(pl.program_id(0) == 0)
    def _():
        stats_ref[...] = jnp.zeros_like(stats_ref)

    stats_ref[...] += jnp.concatenate([s, ss], axis=0)    # (2, Cout)


def conv3x3_bn_stats(x, w, scale=None, shift=None):
    """x: (N,H,W,Cin) f32; w: (3,3,Cin,Cout).  Returns (conv_out f32, stats (2,Cout))."""
    N, H, W, Cin = x.shape
    Cout = w.shape[-1]
    w2d = w.reshape(9 * Cin, Cout).astype(jnp.bfloat16)   # reshaped once, bf16 for the MXU
    fuse = scale is not None

    in_specs = [pl.BlockSpec((1, H, W, Cin), lambda n: (n, 0, 0, 0))]
    operands = [x]
    if fuse:
        in_specs += [pl.BlockSpec((1, Cin), lambda n: (0, 0)),
                     pl.BlockSpec((1, Cin), lambda n: (0, 0))]
        operands += [scale.reshape(1, Cin), shift.reshape(1, Cin)]
    in_specs += [pl.BlockSpec((9 * Cin, Cout), lambda n: (0, 0))]
    operands += [w2d]

    # TODO(synk): for production sizes (e.g. H=W=256, C>=64) tile H into strips with a
    # 1-row halo and round C up to a lane-dense multiple of 128 (plus vmem_limit_bytes),
    # so the same kernel also fits v7x's 64 MiB VMEM; at this demo size one image per
    # grid step is already tiny.
    y, stats = pl.pallas_call(
        functools.partial(_conv3x3_kernel, fuse_bn_relu=fuse),
        out_shape=(jax.ShapeDtypeStruct((N, H, W, Cout), jnp.float32),
                   jax.ShapeDtypeStruct((2, Cout), jnp.float32)),
        grid=(N,),
        in_specs=in_specs,
        out_specs=(pl.BlockSpec((1, H, W, Cout), lambda n: (n, 0, 0, 0)),
                   pl.BlockSpec((2, Cout), lambda n: (0, 0))),
        compiler_params=pltpu.CompilerParams(
            dimension_semantics=("arbitrary",)),  # stats block is revisited (accumulator)
    )(*operands)
    return y, stats


# ----------------------------------------------------------------------------
# Final fused kernel: BN2 (affine form) + ReLU + MaxPool 2x2, emitting both
# x_out and p in one pass (no strided HBM temporaries).
# ----------------------------------------------------------------------------
def _bn_relu_pool_kernel(y_ref, scale_ref, shift_ref, xo_ref, p_ref):
    _, H, W, C = y_ref.shape
    Hh, Wh = H // 2, W // 2

    xo = jnp.maximum(y_ref[0] * scale_ref[...] + shift_ref[...], 0.0)   # (H, W, C) f32
    xo_ref[...] = xo[None]

    # 2x2/stride-2 max pool via lane-preserving reshapes + pairwise max (VPU filler).
    t = xo.reshape(H * Wh, 2, C)                    # pair adjacent columns
    t = jnp.maximum(t[:, 0, :], t[:, 1, :])         # (H*Wh, C)
    t = t.reshape(Hh, 2, Wh, C)                     # pair adjacent rows
    p = jnp.maximum(t[:, 0], t[:, 1])               # (Hh, Wh, C)
    p_ref[...] = p[None]


def bn_relu_pool(y, scale, shift):
    N, H, W, C = y.shape
    return pl.pallas_call(
        _bn_relu_pool_kernel,
        out_shape=(jax.ShapeDtypeStruct((N, H, W, C), jnp.float32),
                   jax.ShapeDtypeStruct((N, H // 2, W // 2, C), jnp.float32)),
        grid=(N,),
        in_specs=[pl.BlockSpec((1, H, W, C), lambda n: (n, 0, 0, 0)),
                  pl.BlockSpec((1, C), lambda n: (0, 0)),
                  pl.BlockSpec((1, C), lambda n: (0, 0))],
        out_specs=(pl.BlockSpec((1, H, W, C), lambda n: (n, 0, 0, 0)),
                   pl.BlockSpec((1, H // 2, W // 2, C), lambda n: (n, 0, 0, 0))),
        compiler_params=pltpu.CompilerParams(
            dimension_semantics=("parallel",)),
    )(y, scale.reshape(1, C), shift.reshape(1, C))


# ----------------------------------------------------------------------------
# Glue: turn accumulated (sum, sumsq) into the BN affine (scale, shift).
# Tiny (C,)-sized vector math — cheap JAX ops between pallas_calls.
# ----------------------------------------------------------------------------
def _bn_affine(stats, gamma, beta, count):
    mean = stats[0] / count
    var = jnp.maximum(stats[1] / count - mean * mean, 0.0)   # biased batch variance
    scale = gamma * lax.rsqrt(var + BN_EPS)
    shift = beta - mean * scale
    return scale, shift


# ----------------------------------------------------------------------------
# Parameter init (PyTorch-default-like uniform bounds) + forward.
# ----------------------------------------------------------------------------
def init_encoder_params(key, in_c, out_c):
    ks = jax.random.split(key, 4)

    def conv_init(kw, kb, cin, cout):
        fan_in = cin * 9
        bound = 1.0 / np.sqrt(fan_in)
        w = jax.random.uniform(kw, (3, 3, cin, cout), jnp.float32, -bound, bound)
        b = jax.random.uniform(kb, (cout,), jnp.float32, -bound, bound)
        return w, b

    w1, b1 = conv_init(ks[0], ks[1], in_c, out_c)
    w2, b2 = conv_init(ks[2], ks[3], out_c, out_c)
    return dict(
        w1=w1, b1=b1, g1=jnp.ones((out_c,), jnp.float32), be1=jnp.zeros((out_c,), jnp.float32),
        w2=w2, b2=b2, g2=jnp.ones((out_c,), jnp.float32), be2=jnp.zeros((out_c,), jnp.float32),
    )


def encoder_block(params, x_nhwc):
    N, H, W, _ = x_nhwc.shape
    count = float(N * H * W)
    # conv1 (+ BN1 statistics); bias omitted: exactly cancelled by BN mean subtraction.
    y1, st1 = conv3x3_bn_stats(x_nhwc, params["w1"])
    sc1, sh1 = _bn_affine(st1, params["g1"], params["be1"], count)
    # conv2 with BN1+ReLU fused onto its input (+ BN2 statistics).
    y2, st2 = conv3x3_bn_stats(y1, params["w2"], scale=sc1, shift=sh1)
    sc2, sh2 = _bn_affine(st2, params["g2"], params["be2"], count)
    # BN2 + ReLU + MaxPool fused, emitting both module outputs.
    x_out, p = bn_relu_pool(y2, sc2, sh2)
    return x_out, p


def _reference(params, x):
    """Pure-JAX f32 reference matching the torch module (bias included)."""
    def conv(x, w, b):
        y = lax.conv_general_dilated(x, w, (1, 1), "SAME",
                                     dimension_numbers=("NHWC", "HWIO", "NHWC"))
        return y + b.reshape(1, 1, 1, -1)

    def bn_relu_ref(x, g, be):
        mean = jnp.mean(x, axis=(0, 1, 2), keepdims=True)
        var = jnp.mean((x - mean) ** 2, axis=(0, 1, 2), keepdims=True)
        return jnp.maximum((x - mean) * lax.rsqrt(var + BN_EPS) * g + be, 0.0)

    h = bn_relu_ref(conv(x, params["w1"], params["b1"]), params["g1"], params["be1"])
    xo = bn_relu_ref(conv(h, params["w2"], params["b2"]), params["g2"], params["be2"])
    p = lax.reduce_window(xo, -jnp.inf, lax.max, (1, 2, 2, 1), (1, 2, 2, 1), "VALID")
    return xo, p


if __name__ == "__main__":
    key = jax.random.PRNGKey(0)
    kx, kp = jax.random.split(key)
    N, C_in, C_out, H, W = 2, 4, 8, 16, 16

    # PyTorch-style NCHW input, transposed to the kernels' NHWC layout.
    x_nchw = jax.random.normal(kx, (N, C_in, H, W), jnp.float32)
    x = jnp.transpose(x_nchw, (0, 2, 3, 1))
    params = init_encoder_params(kp, C_in, C_out)

    x_out, p_out = encoder_block(params, x)
    jax.block_until_ready((x_out, p_out))

    # Kernel uses bf16 MXU operands (f32 accumulation), reference is pure f32,
    # so compare with a bf16-level tolerance.
    x_ref, p_ref = _reference(params, x)
    np.testing.assert_allclose(np.asarray(x_out), np.asarray(x_ref), rtol=5e-2, atol=5e-2)
    np.testing.assert_allclose(np.asarray(p_out), np.asarray(p_ref), rtol=5e-2, atol=5e-2)
    assert x_out.shape == (N, H, W, C_out)
    assert p_out.shape == (N, H // 2, W // 2, C_out)

    print("KERNEL_OK")
</pallas_src>

<mosaic_0001>
module attributes {stable_mosaic.version = 11 : i64} {
  func.func @_conv3x3_kernel(%arg0: i32, %arg1: memref<1x16x16x4xf32, #tpu.memory_space<vmem>>, %arg2: memref<36x8xbf16, #tpu.memory_space<vmem>>, %arg3: memref<1x16x16x8xf32, #tpu.memory_space<vmem>>, %arg4: memref<2x8xf32, #tpu.memory_space<vmem>>) attributes {dimension_semantics = [#tpu.dimension_semantics<arbitrary>], iteration_bounds = array<i64: 2>, scalar_prefetch = 0 : i64, scratch_operands = 0 : i64, tpu.core_type = #tpu.core_type<tc>, window_params = [{transform_indices = @transform_0, window_bounds = array<i64: 1, 16, 16, 4>}, {pipeline_mode = #tpu.pipeline_mode<synchronous>, transform_indices = @transform_1, window_bounds = array<i64: 36, 8>}, {transform_indices = @transform_2, window_bounds = array<i64: 1, 16, 16, 8>}, {pipeline_mode = #tpu.pipeline_mode<synchronous>, transform_indices = @transform_3, window_bounds = array<i64: 2, 8>}]} {
    %c0 = arith.constant 0 : index
    %c0_0 = arith.constant 0 : index
    %c0_1 = arith.constant 0 : index
    %c0_2 = arith.constant 0 : index
    %0 = vector.load %arg1[%c0, %c0_0, %c0_1, %c0_2] : memref<1x16x16x4xf32, #tpu.memory_space<vmem>>, vector<1x16x16x4xf32>
    %1 = vector.shape_cast %0 : vector<1x16x16x4xf32> to vector<16x16x4xf32>
    %2 = arith.truncf %1 : vector<16x16x4xf32> to vector<16x16x4xbf16>
    %cst = arith.constant 0.000000e+00 : bf16
    %3 = vector.broadcast %cst : bf16 to vector<1x16x4xbf16>
    %cst_3 = arith.constant 0.000000e+00 : bf16
    %4 = vector.broadcast %cst_3 : bf16 to vector<18x1x4xbf16>
    %5 = tpu.concatenate %3, %2, %3 in 0 : vector<1x16x4xbf16>, vector<16x16x4xbf16>, vector<1x16x4xbf16> -> vector<18x16x4xbf16>
    %6 = tpu.concatenate %4, %5, %4 in 1 : vector<18x1x4xbf16>, vector<18x16x4xbf16>, vector<18x1x4xbf16> -> vector<18x18x4xbf16>
    %7 = vector.extract_strided_slice %6 {offsets = [0, 0, 0], sizes = [16, 16, 4], strides = [1, 1, 1]} : vector<18x18x4xbf16> to vector<16x16x4xbf16>
    %8 = vector.extract_strided_slice %6 {offsets = [0, 1, 0], sizes = [16, 16, 4], strides = [1, 1, 1]} : vector<18x18x4xbf16> to vector<16x16x4xbf16>
    %9 = vector.extract_strided_slice %6 {offsets = [0, 2, 0], sizes = [16, 16, 4], strides = [1, 1, 1]} : vector<18x18x4xbf16> to vector<16x16x4xbf16>
    %10 = vector.extract_strided_slice %6 {offsets = [1, 0, 0], sizes = [16, 16, 4], strides = [1, 1, 1]} : vector<18x18x4xbf16> to vector<16x16x4xbf16>
    %11 = vector.extract_strided_slice %6 {offsets = [1, 1, 0], sizes = [16, 16, 4], strides = [1, 1, 1]} : vector<18x18x4xbf16> to vector<16x16x4xbf16>
    %12 = vector.extract_strided_slice %6 {offsets = [1, 2, 0], sizes = [16, 16, 4], strides = [1, 1, 1]} : vector<18x18x4xbf16> to vector<16x16x4xbf16>
    %13 = vector.extract_strided_slice %6 {offsets = [2, 0, 0], sizes = [16, 16, 4], strides = [1, 1, 1]} : vector<18x18x4xbf16> to vector<16x16x4xbf16>
    %14 = vector.extract_strided_slice %6 {offsets = [2, 1, 0], sizes = [16, 16, 4], strides = [1, 1, 1]} : vector<18x18x4xbf16> to vector<16x16x4xbf16>
    %15 = vector.extract_strided_slice %6 {offsets = [2, 2, 0], sizes = [16, 16, 4], strides = [1, 1, 1]} : vector<18x18x4xbf16> to vector<16x16x4xbf16>
    %16 = tpu.concatenate %7, %8, %9, %10, %11, %12, %13, %14, %15 in 2 : vector<16x16x4xbf16>, vector<16x16x4xbf16>, vector<16x16x4xbf16>, vector<16x16x4xbf16>, vector<16x16x4xbf16>, vector<16x16x4xbf16>, vector<16x16x4xbf16>, vector<16x16x4xbf16>, vector<16x16x4xbf16> -> vector<16x16x36xbf16>
    %17 = vector.shape_cast %16 : vector<16x16x36xbf16> to vector<256x36xbf16>
    %c0_4 = arith.constant 0 : index
    %c0_5 = arith.constant 0 : index
    %18 = vector.load %arg2[%c0_4, %c0_5] : memref<36x8xbf16, #tpu.memory_space<vmem>>, vector<36x8xbf16>
    %cst_6 = arith.constant dense<0.000000e+00> : vector<256x8xf32>
    %19 = tpu.matmul %17, %18, %cst_6 {dimension_numbers = #tpu.dot_dimension_numbers<[1], [0], [0], [1], [0, 0, 1, 1], [], []>} : vector<256x36xbf16>, vector<36x8xbf16>, vector<256x8xf32> -> vector<256x8xf32>
    %20 = vector.shape_cast %19 : vector<256x8xf32> to vector<1x16x16x8xf32>
    %c0_7 = arith.constant 0 : index
    %c0_8 = arith.constant 0 : index
    %c0_9 = arith.constant 0 : index
    %c0_10 = arith.constant 0 : index
    %21 = vector.load %arg3[%c0_7, %c0_8, %c0_9, %c0_10] : memref<1x16x16x8xf32, #tpu.memory_space<vmem>>, vector<1x16x16x8xf32>
    tpu.vector_store %arg3[%c0_7, %c0_8, %c0_9, %c0_10], %20 {strides = array<i32>} : memref<1x16x16x8xf32, #tpu.memory_space<vmem>>, vector<1x16x16x8xf32>,
    %cst_11 = arith.constant dense<0.000000e+00> : vector<8xf32>
    %22 = vector.multi_reduction <add>, %19, %cst_11 [0] : vector<256x8xf32> to vector<8xf32>
    %23 = vector.shape_cast %22 : vector<8xf32> to vector<1x8xf32>
    %24 = arith.mulf %19, %19 : vector<256x8xf32>
    %cst_12 = arith.constant dense<0.000000e+00> : vector<8xf32>
    %25 = vector.multi_reduction <add>, %24, %cst_12 [0] : vector<256x8xf32> to vector<8xf32>
    %26 = vector.shape_cast %25 : vector<8xf32> to vector<1x8xf32>
    %c0_i32 = arith.constant 0 : i32
    %27 = arith.cmpi eq, %arg0, %c0_i32 : i32
    %28 = arith.extui %27 : i1 to i32
    %c0_i32_13 = arith.constant 0 : i32
    %29 = arith.cmpi ne, %28, %c0_i32_13 : i32
    scf.if %29 {
      %cst_18 = arith.constant 0.000000e+00 : f32
      %34 = vector.broadcast %cst_18 : f32 to vector<2x8xf32>
      %c0_19 = arith.constant 0 : index
      %c0_20 = arith.constant 0 : index
      %35 = vector.load %arg4[%c0_19, %c0_20] : memref<2x8xf32, #tpu.memory_space<vmem>>, vector<2x8xf32>
      tpu.vector_store %arg4[%c0_19, %c0_20], %34 {strides = array<i32>} : memref<2x8xf32, #tpu.memory_space<vmem>>, vector<2x8xf32>,
    } else {
    }
    %c0_14 = arith.constant 0 : index
    %c0_15 = arith.constant 0 : index
    %30 = vector.load %arg4[%c0_14, %c0_15] : memref<2x8xf32, #tpu.memory_space<vmem>>, vector<2x8xf32>
    %31 = tpu.concatenate %23, %26 in 0 : vector<1x8xf32>, vector<1x8xf32> -> vector<2x8xf32>
    %32 = arith.addf %30, %31 : vector<2x8xf32>
    %c0_16 = arith.constant 0 : index
    %c0_17 = arith.constant 0 : index
    %33 = vector.load %arg4[%c0_16, %c0_17] : memref<2x8xf32, #tpu.memory_space<vmem>>, vector<2x8xf32>
    tpu.vector_store %arg4[%c0_16, %c0_17], %32 {strides = array<i32>} : memref<2x8xf32, #tpu.memory_space<vmem>>, vector<2x8xf32>,
    return
  }
  func.func @transform_0(%arg0: i32) -> (i32, i32, i32, i32) {
    %c0_i32 = arith.constant 0 : i32
    %c0_i32_0 = arith.constant 0 : i32
    %c0_i32_1 = arith.constant 0 : i32
    %c0_i32_2 = arith.constant 0 : i32
    return %arg0, %c0_i32, %c0_i32_0, %c0_i32_1 : i32, i32, i32, i32
  }
  func.func @transform_1(%arg0: i32) -> (i32, i32) {
    %c0_i32 = arith.constant 0 : i32
    %c0_i32_0 = arith.constant 0 : i32
    %c0_i32_1 = arith.constant 0 : i32
    return %c0_i32, %c0_i32_0 : i32, i32
  }
  func.func @transform_2(%arg0: i32) -> (i32, i32, i32, i32) {
    %c0_i32 = arith.constant 0 : i32
    %c0_i32_0 = arith.constant 0 : i32
    %c0_i32_1 = arith.constant 0 : i32
    %c0_i32_2 = arith.constant 0 : i32
    return %arg0, %c0_i32, %c0_i32_0, %c0_i32_1 : i32, i32, i32, i32
  }
  func.func @transform_3(%arg0: i32) -> (i32, i32) {
    %c0_i32 = arith.constant 0 : i32
    %c0_i32_0 = arith.constant 0 : i32
    %c0_i32_1 = arith.constant 0 : i32
    return %c0_i32, %c0_i32_0 : i32, i32
  }
}

</mosaic_0001>

<llo_original>
// kernel: tpu_custom_call.1
$region0: #{tpu_custom_call.1}
  #allocation0 [shape = 'u32[]', space=smem, size = 0x4, offset = 0x4, fixed_abs, tag = 'smem constant byte address 0x4 - core index']
  #allocation1 [shape = 'u32[144,128]{1,0:T(1,128)}', space=vmem, size = 0x12000, scoped, tag = 'internal scratch']
  %s0 = inlined_call_operand.vmem [shape: f32[2,16,16,4], index: 0, kind: input, shape index: {}]
  %s1 = inlined_call_operand.vmem [shape: bf16[36,8], index: 1, kind: input, shape index: {}]
  %s2 = inlined_call_operand.vmem [shape: f32[2,16,16,8], index: 2, kind: output, shape index: {0}]
  %s3 = inlined_call_operand.hbm [shape: f32[2,8], index: 3, kind: output, shape index: {1}]
  %4 = xla_tuple %s2, %s3
  %s5 = sld [smem:[#allocation0]]
  $region53: #{tpu_custom_call.1} parent=0
    _
  %s7 = ssub.s32 1, %s5
  %s8 = scalar_select 0, %s7, %s5
  $region1: #{tpu_custom_call.1} parent=0
    #allocation2 [shape = 'u8[1024]{0}', space=vmem, size = 0x400, scoped, tag = 'output window, operand 1, single buffered']
    #allocation3 [shape = 's32[2]{0}', space=sflag, size = 0x8, scoped, tag = 'scoped memory for tpu_custom_call.1']
    %9 = vsyncpa [#allocation3], 0
    loop: start=0, step=1, limit=4
    $region2: #{tpu_custom_call.1} parent=1 // loop_pre_header
      _
    $region3: #{tpu_custom_call.1} parent=1 // loop_header
      %s11 = sphi 0, %s15
      %p12 = scmp.ge.s32.totalorder %s11, 4
      %s21 = sphi 0, %s23
      %s24 = sphi 0, %s21
      %s25 = sphi 0, %s24
      %s41 = sphi 0, %s25
      %s45 = sphi 0, %s45
      %s47 = sphi 0, %s45
      %s48 = sphi 0, %s47
      %s62 = sphi 0, %s48
      %s68 = sphi 0, %s70
      %s71 = sphi 0, %s68
      %s72 = sphi 0, %s71
      %s88 = sphi 0, %s72
      %s92 = sphi 0, %s92
      %s94 = sphi 0, %s92
      %s95 = sphi 0, %s94
      %s109 = sphi 0, %s95
    $region4: #{tpu_custom_call.1} parent=1 // loop_header_branch
      %14 = sbr.rel (%p12) target = $region8
    $region5: #{tpu_custom_call.1} parent=1 // loop_body
      %s16 = ssub.s32 %s11, 1
      %s17 = ssub.s32 %s11, 2
      %s18 = sadd.s32 %s11, 1
      %s19 = ssub.s32 %s11, %s18
      %p20 = scmp.eq.s32.totalorder %s19, 0
      %s22 = sadd.s32 %s21, 1
      %s23 = scalar_select %p20, %s21, %s22
      %p26 = pneg %p20
      %p27 = scmp.eq.s32.totalorder %s11, 1
      %p28 = por %p26, %p27
      %p29 = scmp.ne.s32.totalorder %s21, %s24
      %p30 = scmp.eq.s32.totalorder %s11, 0
      %p31 = por %p29, %p30
      %p32 = scmp.ne.s32.totalorder %s21, %s24
      %p33 = scmp.eq.s32.totalorder %s16, 1
      %p34 = por %p32, %p33
      %p35 = scmp.ne.s32.totalorder %s24, %s25
      %p36 = scmp.eq.s32.totalorder %s16, 0
      %p37 = por %p35, %p36
      %p38 = scmp.ne.s32.totalorder %s24, %s25
      %p39 = scmp.eq.s32.totalorder %s17, 1
      %p40 = por %p38, %p39
      %p42 = scmp.ne.s32.totalorder %s25, %s41
      %p43 = scmp.eq.s32.totalorder %s17, 0
      %p44 = por %p42, %p43
      %s46 = sadd.s32 %s45, 1
      %p49 = scmp.eq.s32.totalorder %s11, 1
      %p50 = scmp.ne.s32.totalorder %s45, %s47
      %p51 = scmp.eq.s32.totalorder %s11, 0
      %p52 = por %p50, %p51
      %p53 = scmp.ne.s32.totalorder %s45, %s47
      %p54 = scmp.eq.s32.totalorder %s16, 1
      %p55 = por %p53, %p54
      %p56 = scmp.ne.s32.totalorder %s47, %s48
      %p57 = scmp.eq.s32.totalorder %s16, 0
      %p58 = por %p56, %p57
      %p59 = scmp.ne.s32.totalorder %s47, %s48
      %p60 = scmp.eq.s32.totalorder %s17, 1
      %p61 = por %p59, %p60
      %p63 = scmp.ne.s32.totalorder %s48, %s62
      %p64 = scmp.eq.s32.totalorder %s17, 0
      %p65 = por %p63, %p64
      %s66 = ssub.s32 %s11, %s18
      %p67 = scmp.eq.s32.totalorder %s66, 0
      %s69 = sadd.s32 %s68, 1
      %s70 = scalar_select %p67, %s68, %s69
      %p73 = pneg %p67
      %p74 = scmp.eq.s32.totalorder %s11, 1
      %p75 = por %p73, %p74
      %p76 = scmp.ne.s32.totalorder %s68, %s71
      %p77 = scmp.eq.s32.totalorder %s11, 0
      %p78 = por %p76, %p77
      %p79 = scmp.ne.s32.totalorder %s68, %s71
      %p80 = scmp.eq.s32.totalorder %s16, 1
      %p81 = por %p79, %p80
      %p82 = scmp.ne.s32.totalorder %s71, %s72
      %p83 = scmp.eq.s32.totalorder %s16, 0
      %p84 = por %p82, %p83
      %p85 = scmp.ne.s32.totalorder %s71, %s72
      %p86 = scmp.eq.s32.totalorder %s17, 1
      %p87 = por %p85, %p86
      %p89 = scmp.ne.s32.totalorder %s72, %s88
      %p90 = scmp.eq.s32.totalorder %s17, 0
      %p91 = por %p89, %p90
      %s93 = sadd.s32 %s92, 1
      %p96 = scmp.eq.s32.totalorder %s11, 1
      %p97 = scmp.ne.s32.totalorder %s92, %s94
      %p98 = scmp.eq.s32.totalorder %s11, 0
      %p99 = por %p97, %p98
      %p100 = scmp.ne.s32.totalorder %s92, %s94
      %p101 = scmp.eq.s32.totalorder %s16, 1
      %p102 = por %p100, %p101
      %p103 = scmp.ne.s32.totalorder %s94, %s95
      %p104 = scmp.eq.s32.totalorder %s16, 0
      %p105 = por %p103, %p104
      %p106 = scmp.ne.s32.totalorder %s94, %s95
      %p107 = scmp.eq.s32.totalorder %s17, 1
      %p108 = por %p106, %p107
      %p110 = scmp.ne.s32.totalorder %s95, %s109
      %p111 = scmp.eq.s32.totalorder %s17, 0
      %p112 = por %p110, %p111
      %p113 = scmp.le.s32.totalorder 1, %s11
      %p114 = scmp.lt.s32.totalorder %s11, 3
      %p115 = pnand %p113, %p114
      %p116 = pneg %p115
      // Predicated region
      $region9: #{tpu_custom_call.1} parent=5 // pred_check
        _
      $region10: #{tpu_custom_call.1} parent=5 // pred_check_branch
        %118 = sbr.rel (%p115) target = $region12
      $region11: #{tpu_custom_call.1} parent=5 // pred_region
        %s119 = ssub.s32 %s11, 1
        // Predicated region
        $region13: #{tpu_custom_call.1} parent=11 // pred_check
          %p120 = pneg %p58
        $region14: #{tpu_custom_call.1} parent=11 // pred_check_branch
          %122 = sbr.rel (%p120) target = $region16
        $region15: #{tpu_custom_call.1} parent=11 // pred_region
          _
        $region16: #{tpu_custom_call.1} parent=11 // pred_fallthru
          _
      $region12: #{tpu_custom_call.1} parent=5 // pred_fallthru
        _
      %p123 = scmp.lt.s32.totalorder %s11, 2
      // Predicated region
      $region17: #{tpu_custom_call.1} parent=5 // pred_check
        %p124 = pneg %p123
      $region18: #{tpu_custom_call.1} parent=5 // pred_check_branch
        %126 = sbr.rel (%p124) target = $region20
      $region19: #{tpu_custom_call.1} parent=5 // pred_region
        // Predicated region
        $region21: #{tpu_custom_call.1} parent=19 // pred_check
          %p127 = pneg %p31
        $region22: #{tpu_custom_call.1} parent=19 // pred_check_branch
          %129 = sbr.rel (%p127) target = $region24
        $region23: #{tpu_custom_call.1} parent=19 // pred_region
          %p130 = scmp.lt.s32.totalorder %s11, 1
          %s131 = scalar_select %p130, %s11, 1
          %s132 = smul.addr %s131, 32
          %s133 = smul.addr %s132, 8
          %s134 = scalar_lea.vmem %s0, %s133
        $region24: #{tpu_custom_call.1} parent=19 // pred_fallthru
          _
      $region20: #{tpu_custom_call.1} parent=5 // pred_fallthru
        _
      %p135 = scmp.le.s32.totalorder 1, %s11
      %p136 = scmp.lt.s32.totalorder %s11, 3
      %p137 = pnand %p135, %p136
      %p138 = pneg %p137
      // Predicated region
      $region25: #{tpu_custom_call.1} parent=5 // pred_check
        _
      $region26: #{tpu_custom_call.1} parent=5 // pred_check_branch
        %140 = sbr.rel (%p137) target = $region28
      $region27: #{tpu_custom_call.1} parent=5 // pred_region
        %s141 = ssub.s32 %s11, 1
        %p142 = scmp.lt.s32.totalorder %s16, 1
        %s143 = scalar_select %p142, %s16, 1
        %s144 = smul.addr %s143, 32
        %s145 = smul.addr %s144, 8
        %s146 = scalar_lea.vmem %s0, %s145
        %p147 = pneg %p37
        %p148 = pneg %p34
        %p149 = pneg %p58
        %p150 = pneg %p55
        %p151 = pneg %p84
        %p152 = pneg %p81
        %p153 = scmp.lt.s32.totalorder %s16, 1
        %s154 = scalar_select %p153, %s16, 1
        %s155 = smul.addr %s154, 32
        %s156 = smul.addr %s155, 8
        %s157 = scalar_lea.vmem %s2, %s156
        %p158 = pneg %p105
        %p159 = pneg %p102
        %p160 = scmp.lt.s32.totalorder %s16, 1
        %s161 = scalar_select %p160, %s16, 1
        %s162 = smul.addr %s161, 32
        %s163 = smul.addr %s162, 8
        %s164 = scalar_lea.vmem %s0, %s163
        %p165 = scmp.lt.s32.totalorder %s16, 1
        %s166 = scalar_select %p165, %s16, 1
        %s167 = smul.addr %s166, 32
        %s168 = smul.addr %s167, 8
        %s169 = scalar_lea.vmem %s2, %s168
        %v171 = vld [vmem:[%s164] sm:$0xff]
        %v172 = vld [vmem:[%s164 + $0x8] sm:$0xff]
        %v173 = vld [vmem:[%s164 + $0x10] sm:$0xff]
        %v174 = vld [vmem:[%s164 + $0x18] sm:$0xff]
        %v175 = vld [vmem:[%s164 + $0x20] sm:$0xff]
        %v176 = vld [vmem:[%s164 + $0x28] sm:$0xff]
        %v177 = vld [vmem:[%s164 + $0x30] sm:$0xff]
        %v178 = vld [vmem:[%s164 + $0x38] sm:$0xff]
        %v179 = vld [vmem:[%s164 + $0x40] sm:$0xff]
        %v180 = vld [vmem:[%s164 + $0x48] sm:$0xff]
        %v181 = vld [vmem:[%s164 + $0x50] sm:$0xff]
        %v182 = vld [vmem:[%s164 + $0x58] sm:$0xff]
        %v183 = vld [vmem:[%s164 + $0x60] sm:$0xff]
        %v184 = vld [vmem:[%s164 + $0x68] sm:$0xff]
        %v185 = vld [vmem:[%s164 + $0x70] sm:$0xff]
        %v186 = vld [vmem:[%s164 + $0x78] sm:$0xff]
        %v187 = vld [vmem:[%s164 + $0x80] sm:$0xff]
        %v188 = vld [vmem:[%s164 + $0x88] sm:$0xff]
        %v189 = vld [vmem:[%s164 + $0x90] sm:$0xff]
        %v190 = vld [vmem:[%s164 + $0x98] sm:$0xff]
        %v191 = vld [vmem:[%s164 + $0xa0] sm:$0xff]
        %v192 = vld [vmem:[%s164 + $0xa8] sm:$0xff]
        %v193 = vld [vmem:[%s164 + $0xb0] sm:$0xff]
        %v194 = vld [vmem:[%s164 + $0xb8] sm:$0xff]
        %v195 = vld [vmem:[%s164 + $0xc0] sm:$0xff]
        %v196 = vld [vmem:[%s164 + $0xc8] sm:$0xff]
        %v197 = vld [vmem:[%s164 + $0xd0] sm:$0xff]
        %v198 = vld [vmem:[%s164 + $0xd8] sm:$0xff]
        %v199 = vld [vmem:[%s164 + $0xe0] sm:$0xff]
        %v200 = vld [vmem:[%s164 + $0xe8] sm:$0xff]
        %v201 = vld [vmem:[%s164 + $0xf0] sm:$0xff]
        %v202 = vld [vmem:[%s164 + $0xf8] sm:$0xff]
        %v203 = vpack.c.bf16 %v172, %v171
        %v204 = vpack.c.bf16 %v174, %v173
        %v205 = vpack.c.bf16 %v176, %v175
        %v206 = vpack.c.bf16 %v178, %v177
        %v207 = vpack.c.bf16 %v180, %v179
        %v208 = vpack.c.bf16 %v182, %v181
        %v209 = vpack.c.bf16 %v184, %v183
        %v210 = vpack.c.bf16 %v186, %v185
        %v211 = vpack.c.bf16 %v188, %v187
        %v212 = vpack.c.bf16 %v190, %v189
        %v213 = vpack.c.bf16 %v192, %v191
        %v214 = vpack.c.bf16 %v194, %v193
        %v215 = vpack.c.bf16 %v196, %v195
        %v216 = vpack.c.bf16 %v198, %v197
        %v217 = vpack.c.bf16 %v200, %v199
        %v218 = vpack.c.bf16 %v202, %v201
        %v220 = vshrl.u32 0, 16
        %v222 = vrot.slane %v220, 7
        %v223 = vshll.u32 0, 16
        %v225 = vor.u32 %v222, %v223
        %v227 = vshrl.u32 %v203, 16
        %v229 = vrot.slane %v227, 7
        %v230 = vshll.u32 %v203, 16
        %v232 = vor.u32 %v229, %v230
        %v234 = vshrl.u32 %v204, 16
        %v236 = vrot.slane %v234, 7
        %v237 = vshll.u32 %v204, 16
        %v239 = vor.u32 %v236, %v237
        %v241 = vshrl.u32 %v205, 16
        %v243 = vrot.slane %v241, 7
        %v244 = vshll.u32 %v205, 16
        %v246 = vor.u32 %v243, %v244
        %v248 = vshrl.u32 %v206, 16
        %v250 = vrot.slane %v248, 7
        %v251 = vshll.u32 %v206, 16
        %v253 = vor.u32 %v250, %v251
        %v255 = vshrl.u32 %v207, 16
        %v257 = vrot.slane %v255, 7
        %v258 = vshll.u32 %v207, 16
        %v260 = vor.u32 %v257, %v258
        %v262 = vshrl.u32 %v208, 16
        %v264 = vrot.slane %v262, 7
        %v265 = vshll.u32 %v208, 16
        %v267 = vor.u32 %v264, %v265
        %v269 = vshrl.u32 %v209, 16
        %v271 = vrot.slane %v269, 7
        %v272 = vshll.u32 %v209, 16
        %v274 = vor.u32 %v271, %v272
        %v276 = vshrl.u32 %v210, 16
        %v278 = vrot.slane %v276, 7
        %v279 = vshll.u32 %v210, 16
        %v281 = vor.u32 %v278, %v279
        %v283 = vshrl.u32 %v211, 16
        %v285 = vrot.slane %v283, 7
        %v286 = vshll.u32 %v211, 16
        %v288 = vor.u32 %v285, %v286
        %v290 = vshrl.u32 %v212, 16
        %v292 = vrot.slane %v290, 7
        %v293 = vshll.u32 %v212, 16
        %v295 = vor.u32 %v292, %v293
        %v297 = vshrl.u32 %v213, 16
        %v299 = vrot.slane %v297, 7
        %v300 = vshll.u32 %v213, 16
        %v302 = vor.u32 %v299, %v300
        %v304 = vshrl.u32 %v214, 16
        %v306 = vrot.slane %v304, 7
        %v307 = vshll.u32 %v214, 16
        %v309 = vor.u32 %v306, %v307
        %v311 = vshrl.u32 %v215, 16
        %v313 = vrot.slane %v311, 7
        %v314 = vshll.u32 %v215, 16
        %v316 = vor.u32 %v313, %v314
        %v318 = vshrl.u32 %v216, 16
        %v320 = vrot.slane %v318, 7
        %v321 = vshll.u32 %v216, 16
        %v323 = vor.u32 %v320, %v321
        %v325 = vshrl.u32 %v217, 16
        %v327 = vrot.slane %v325, 7
        %v328 = vshll.u32 %v217, 16
        %v330 = vor.u32 %v327, %v328
        %v332 = vshrl.u32 %v218, 16
        %v334 = vrot.slane %v332, 7
        %v335 = vshll.u32 %v218, 16
        %v337 = vor.u32 %v334, %v335
        %vm372 = vcmask 1040384
        %vm373 = vsmask.f32 256
        %vm374 = vmand %vm372, %vm373
        %v375 = vsel %vm374, 0, %v225
        %v376 = vsel %vm374, 0, %v232
        %v377 = vsel %vm374, 0, %v239
        %v378 = vsel %vm374, 0, %v246
        %v379 = vsel %vm374, 0, %v253
        %v380 = vsel %vm374, 0, %v260
        %v381 = vsel %vm374, 0, %v267
        %v382 = vsel %vm374, 0, %v274
        %v383 = vsel %vm374, 0, %v281
        %v384 = vsel %vm374, 0, %v288
        %v385 = vsel %vm374, 0, %v295
        %v386 = vsel %vm374, 0, %v302
        %v387 = vsel %vm374, 0, %v309
        %v388 = vsel %vm374, 0, %v316
        %v389 = vsel %vm374, 0, %v323
        %v390 = vsel %vm374, 0, %v330
        %v391 = vsel %vm374, 0, %v337
        %v392 = vsel %vm374, %v222, 0
        %v393 = vsel %vm374, %v229, 0
        %v394 = vsel %vm374, %v236, 0
        %v395 = vsel %vm374, %v243, 0
        %v396 = vsel %vm374, %v250, 0
        %v397 = vsel %vm374, %v257, 0
        %v398 = vsel %vm374, %v264, 0
        %v399 = vsel %vm374, %v271, 0
        %v400 = vsel %vm374, %v278, 0
        %v401 = vsel %vm374, %v285, 0
        %v402 = vsel %vm374, %v292, 0
        %v403 = vsel %vm374, %v299, 0
        %v404 = vsel %vm374, %v306, 0
        %v405 = vsel %vm374, %v313, 0
        %v406 = vsel %vm374, %v320, 0
        %v407 = vsel %vm374, %v327, 0
        %v408 = vsel %vm374, %v334, 0
        %vm409 = vsmask.f32 7424
        %v411 = vshrl.u32 %v375, 16
        %v413 = vshll.u32 %v375, 16
        %v415 = vrot.slane %v413, 1
        %v416 = vor.u32 %v411, %v415
        %v418 = vshll.u32 %v392, 16
        %v420 = vrot.slane %v418, 1
        %v421 = vsel %vm409, %v416, %v420
        %v423 = vshrl.u32 %v376, 16
        %v425 = vshll.u32 %v376, 16
        %v427 = vrot.slane %v425, 1
        %v428 = vor.u32 %v423, %v427
        %v430 = vshll.u32 %v393, 16
        %v432 = vrot.slane %v430, 1
        %v433 = vsel %vm409, %v428, %v432
        %v435 = vshrl.u32 %v377, 16
        %v437 = vshll.u32 %v377, 16
        %v439 = vrot.slane %v437, 1
        %v440 = vor.u32 %v435, %v439
        %v442 = vshll.u32 %v394, 16
        %v444 = vrot.slane %v442, 1
        %v445 = vsel %vm409, %v440, %v444
        %v447 = vshrl.u32 %v378, 16
        %v449 = vshll.u32 %v378, 16
        %v451 = vrot.slane %v449, 1
        %v452 = vor.u32 %v447, %v451
        %v454 = vshll.u32 %v395, 16
        %v456 = vrot.slane %v454, 1
        %v457 = vsel %vm409, %v452, %v456
        %v459 = vshrl.u32 %v379, 16
        %v461 = vshll.u32 %v379, 16
        %v463 = vrot.slane %v461, 1
        %v464 = vor.u32 %v459, %v463
        %v466 = vshll.u32 %v396, 16
        %v468 = vrot.slane %v466, 1
        %v469 = vsel %vm409, %v464, %v468
        %v471 = vshrl.u32 %v380, 16
        %v473 = vshll.u32 %v380, 16
        %v475 = vrot.slane %v473, 1
        %v476 = vor.u32 %v471, %v475
        %v478 = vshll.u32 %v397, 16
        %v480 = vrot.slane %v478, 1
        %v481 = vsel %vm409, %v476, %v480
        %v483 = vshrl.u32 %v381, 16
        %v485 = vshll.u32 %v381, 16
        %v487 = vrot.slane %v485, 1
        %v488 = vor.u32 %v483, %v487
        %v490 = vshll.u32 %v398, 16
        %v492 = vrot.slane %v490, 1
        %v493 = vsel %vm409, %v488, %v492
        %v495 = vshrl.u32 %v382, 16
        %v497 = vshll.u32 %v382, 16
        %v499 = vrot.slane %v497, 1
        %v500 = vor.u32 %v495, %v499
        %v502 = vshll.u32 %v399, 16
        %v504 = vrot.slane %v502, 1
        %v505 = vsel %vm409, %v500, %v504
        %v507 = vshrl.u32 %v383, 16
        %v509 = vshll.u32 %v383, 16
        %v511 = vrot.slane %v509, 1
        %v512 = vor.u32 %v507, %v511
        %v514 = vshll.u32 %v400, 16
        %v516 = vrot.slane %v514, 1
        %v517 = vsel %vm409, %v512, %v516
        %v519 = vshrl.u32 %v384, 16
        %v521 = vshll.u32 %v384, 16
        %v523 = vrot.slane %v521, 1
        %v524 = vor.u32 %v519, %v523
        %v526 = vshll.u32 %v401, 16
        %v528 = vrot.slane %v526, 1
        %v529 = vsel %vm409, %v524, %v528
        %v531 = vshrl.u32 %v385, 16
        %v533 = vshll.u32 %v385, 16
        %v535 = vrot.slane %v533, 1
        %v536 = vor.u32 %v531, %v535
        %v538 = vshll.u32 %v402, 16
        %v540 = vrot.slane %v538, 1
        %v541 = vsel %vm409, %v536, %v540
        %v543 = vshrl.u32 %v386, 16
        %v545 = vshll.u32 %v386, 16
        %v547 = vrot.slane %v545, 1
        %v548 = vor.u32 %v543, %v547
        %v550 = vshll.u32 %v403, 16
        %v552 = vrot.slane %v550, 1
        %v553 = vsel %vm409, %v548, %v552
        %v555 = vshrl.u32 %v387, 16
        %v557 = vshll.u32 %v387, 16
        %v559 = vrot.slane %v557, 1
        %v560 = vor.u32 %v555, %v559
        %v562 = vshll.u32 %v404, 16
        %v564 = vrot.slane %v562, 1
        %v565 = vsel %vm409, %v560, %v564
        %v567 = vshrl.u32 %v388, 16
        %v569 = vshll.u32 %v388, 16
        %v571 = vrot.slane %v569, 1
        %v572 = vor.u32 %v567, %v571
        %v574 = vshll.u32 %v405, 16
        %v576 = vrot.slane %v574, 1
        %v577 = vsel %vm409, %v572, %v576
        %v579 = vshrl.u32 %v389, 16
        %v581 = vshll.u32 %v389, 16
        %v583 = vrot.slane %v581, 1
        %v584 = vor.u32 %v579, %v583
        %v586 = vshll.u32 %v406, 16
        %v588 = vrot.slane %v586, 1
        %v589 = vsel %vm409, %v584, %v588
        %v591 = vshrl.u32 %v390, 16
        %v593 = vshll.u32 %v390, 16
        %v595 = vrot.slane %v593, 1
        %v596 = vor.u32 %v591, %v595
        %v598 = vshll.u32 %v407, 16
        %v600 = vrot.slane %v598, 1
        %v601 = vsel %vm409, %v596, %v600
        %602 = vrot.lane.b32.xlu0 %v421, 4
        %v603 = vpop.permute.xlu0 %602
        %604 = vrot.lane.b32.xlu0 %v433, 4
        %v605 = vpop.permute.xlu0 %604
        %606 = vrot.lane.b32.xlu0 %v445, 4
        %v607 = vpop.permute.xlu0 %606
        %608 = vrot.lane.b32.xlu0 %v457, 4
        %v609 = vpop.permute.xlu0 %608
        %610 = vrot.lane.b32.xlu0 %v469, 4
        %v611 = vpop.permute.xlu0 %610
        %612 = vrot.lane.b32.xlu0 %v481, 4
        %v613 = vpop.permute.xlu0 %612
        %614 = vrot.lane.b32.xlu0 %v493, 4
        %v615 = vpop.permute.xlu0 %614
        %616 = vrot.lane.b32.xlu0 %v505, 4
        %v617 = vpop.permute.xlu0 %616
        %618 = vrot.lane.b32.xlu0 %v517, 4
        %v619 = vpop.permute.xlu0 %618
        %620 = vrot.lane.b32.xlu0 %v529, 4
        %v621 = vpop.permute.xlu0 %620
        %622 = vrot.lane.b32.xlu0 %v541, 4
        %v623 = vpop.permute.xlu0 %622
        %624 = vrot.lane.b32.xlu0 %v553, 4
        %v625 = vpop.permute.xlu0 %624
        %626 = vrot.lane.b32.xlu0 %v565, 4
        %v627 = vpop.permute.xlu0 %626
        %628 = vrot.lane.b32.xlu0 %v577, 4
        %v629 = vpop.permute.xlu0 %628
        %630 = vrot.lane.b32.xlu0 %v589, 4
        %v631 = vpop.permute.xlu0 %630
        %632 = vrot.lane.b32.xlu0 %v601, 4
        %v633 = vpop.permute.xlu0 %632
        %vm666 = vcmask 1046528
        %v667 = vrot.slane %v375, 1
        %v668 = vrot.slane %v392, 1
        %v669 = vsel %vm666, %v667, %v668
        %v670 = vrot.slane %v376, 1
        %v671 = vrot.slane %v393, 1
        %v672 = vsel %vm666, %v670, %v671
        %v673 = vrot.slane %v377, 1
        %v674 = vrot.slane %v394, 1
        %v675 = vsel %vm666, %v673, %v674
        %v676 = vrot.slane %v378, 1
        %v677 = vrot.slane %v395, 1
        %v678 = vsel %vm666, %v676, %v677
        %v679 = vrot.slane %v379, 1
        %v680 = vrot.slane %v396, 1
        %v681 = vsel %vm666, %v679, %v680
        %v682 = vrot.slane %v380, 1
        %v683 = vrot.slane %v397, 1
        %v684 = vsel %vm666, %v682, %v683
        %v685 = vrot.slane %v381, 1
        %v686 = vrot.slane %v398, 1
        %v687 = vsel %vm666, %v685, %v686
        %v688 = vrot.slane %v382, 1
        %v689 = vrot.slane %v399, 1
        %v690 = vsel %vm666, %v688, %v689
        %v691 = vrot.slane %v383, 1
        %v692 = vrot.slane %v400, 1
        %v693 = vsel %vm666, %v691, %v692
        %v694 = vrot.slane %v384, 1
        %v695 = vrot.slane %v401, 1
        %v696 = vsel %vm666, %v694, %v695
        %v697 = vrot.slane %v385, 1
        %v698 = vrot.slane %v402, 1
        %v699 = vsel %vm666, %v697, %v698
        %v700 = vrot.slane %v386, 1
        %v701 = vrot.slane %v403, 1
        %v702 = vsel %vm666, %v700, %v701
        %v703 = vrot.slane %v387, 1
        %v704 = vrot.slane %v404, 1
        %v705 = vsel %vm666, %v703, %v704
        %v706 = vrot.slane %v388, 1
        %v707 = vrot.slane %v405, 1
        %v708 = vsel %vm666, %v706, %v707
        %v709 = vrot.slane %v389, 1
        %v710 = vrot.slane %v406, 1
        %v711 = vsel %vm666, %v709, %v710
        %v712 = vrot.slane %v390, 1
        %v713 = vrot.slane %v407, 1
        %v714 = vsel %vm666, %v712, %v713
        %715 = vrot.lane.b32.xlu0 %v669, 8
        %v716 = vpop.permute.xlu0 %715
        %717 = vrot.lane.b32.xlu0 %v672, 8
        %v718 = vpop.permute.xlu0 %717
        %719 = vrot.lane.b32.xlu0 %v675, 8
        %v720 = vpop.permute.xlu0 %719
        %721 = vrot.lane.b32.xlu0 %v678, 8
        %v722 = vpop.permute.xlu0 %721
        %723 = vrot.lane.b32.xlu0 %v681, 8
        %v724 = vpop.permute.xlu0 %723
        %725 = vrot.lane.b32.xlu0 %v684, 8
        %v726 = vpop.permute.xlu0 %725
        %727 = vrot.lane.b32.xlu0 %v687, 8
        %v728 = vpop.permute.xlu0 %727
        %729 = vrot.lane.b32.xlu0 %v690, 8
        %v730 = vpop.permute.xlu0 %729
        %731 = vrot.lane.b32.xlu0 %v693, 8
        %v732 = vpop.permute.xlu0 %731
        %733 = vrot.lane.b32.xlu0 %v696, 8
        %v734 = vpop.permute.xlu0 %733
        %735 = vrot.lane.b32.xlu0 %v699, 8
        %v736 = vpop.permute.xlu0 %735
        %737 = vrot.lane.b32.xlu0 %v702, 8
        %v738 = vpop.permute.xlu0 %737
        %739 = vrot.lane.b32.xlu0 %v705, 8
        %v740 = vpop.permute.xlu0 %739
        %741 = vrot.lane.b32.xlu0 %v708, 8
        %v742 = vpop.permute.xlu0 %741
        %743 = vrot.lane.b32.xlu0 %v711, 8
        %v744 = vpop.permute.xlu0 %743
        %745 = vrot.lane.b32.xlu0 %v714, 8
        %v746 = vpop.permute.xlu0 %745
        %748 = vrot.lane.b32.xlu0 %v376, 12
        %v749 = vpop.permute.xlu0 %748
        %750 = vrot.lane.b32.xlu0 %v377, 12
        %v751 = vpop.permute.xlu0 %750
        %752 = vrot.lane.b32.xlu0 %v378, 12
        %v753 = vpop.permute.xlu0 %752
        %754 = vrot.lane.b32.xlu0 %v379, 12
        %v755 = vpop.permute.xlu0 %754
        %756 = vrot.lane.b32.xlu0 %v380, 12
        %v757 = vpop.permute.xlu0 %756
        %758 = vrot.lane.b32.xlu0 %v381, 12
        %v759 = vpop.permute.xlu0 %758
        %760 = vrot.lane.b32.xlu0 %v382, 12
        %v761 = vpop.permute.xlu0 %760
        %762 = vrot.lane.b32.xlu0 %v383, 12
        %v763 = vpop.permute.xlu0 %762
        %764 = vrot.lane.b32.xlu0 %v384, 12
        %v765 = vpop.permute.xlu0 %764
        %766 = vrot.lane.b32.xlu0 %v385, 12
        %v767 = vpop.permute.xlu0 %766
        %768 = vrot.lane.b32.xlu0 %v386, 12
        %v769 = vpop.permute.xlu0 %768
        %770 = vrot.lane.b32.xlu0 %v387, 12
        %v771 = vpop.permute.xlu0 %770
        %772 = vrot.lane.b32.xlu0 %v388, 12
        %v773 = vpop.permute.xlu0 %772
        %774 = vrot.lane.b32.xlu0 %v389, 12
        %v775 = vpop.permute.xlu0 %774
        %776 = vrot.lane.b32.xlu0 %v390, 12
        %v777 = vpop.permute.xlu0 %776
        %778 = vrot.lane.b32.xlu0 %v391, 12
        %v779 = vpop.permute.xlu0 %778
        %v781 = vshrl.u32 %v391, 16
        %v783 = vshll.u32 %v391, 16
        %v785 = vrot.slane %v783, 1
        %v786 = vor.u32 %v781, %v785
        %v788 = vshll.u32 %v408, 16
        %v790 = vrot.slane %v788, 1
        %v791 = vsel %vm409, %v786, %v790
        %792 = vrot.lane.b32.xlu0 %v433, 16
        %v793 = vpop.permute.xlu0 %792
        %794 = vrot.lane.b32.xlu0 %v445, 16
        %v795 = vpop.permute.xlu0 %794
        %796 = vrot.lane.b32.xlu0 %v457, 16
        %v797 = vpop.permute.xlu0 %796
        %798 = vrot.lane.b32.xlu0 %v469, 16
        %v799 = vpop.permute.xlu0 %798
        %800 = vrot.lane.b32.xlu0 %v481, 16
        %v801 = vpop.permute.xlu0 %800
        %802 = vrot.lane.b32.xlu0 %v493, 16
        %v803 = vpop.permute.xlu0 %802
        %804 = vrot.lane.b32.xlu0 %v505, 16
        %v805 = vpop.permute.xlu0 %804
        %806 = vrot.lane.b32.xlu0 %v517, 16
        %v807 = vpop.permute.xlu0 %806
        %808 = vrot.lane.b32.xlu0 %v529, 16
        %v809 = vpop.permute.xlu0 %808
        %810 = vrot.lane.b32.xlu0 %v541, 16
        %v811 = vpop.permute.xlu0 %810
        %812 = vrot.lane.b32.xlu0 %v553, 16
        %v813 = vpop.permute.xlu0 %812
        %814 = vrot.lane.b32.xlu0 %v565, 16
        %v815 = vpop.permute.xlu0 %814
        %816 = vrot.lane.b32.xlu0 %v577, 16
        %v817 = vpop.permute.xlu0 %816
        %818 = vrot.lane.b32.xlu0 %v589, 16
        %v819 = vpop.permute.xlu0 %818
        %820 = vrot.lane.b32.xlu0 %v601, 16
        %v821 = vpop.permute.xlu0 %820
        %822 = vrot.lane.b32.xlu0 %v791, 16
        %v823 = vpop.permute.xlu0 %822
        %v825 = vrot.slane %v391, 1
        %v826 = vrot.slane %v408, 1
        %v827 = vsel %vm666, %v825, %v826
        %828 = vrot.lane.b32.xlu0 %v672, 20
        %v829 = vpop.permute.xlu0 %828
        %830 = vrot.lane.b32.xlu0 %v675, 20
        %v831 = vpop.permute.xlu0 %830
        %832 = vrot.lane.b32.xlu0 %v678, 20
        %v833 = vpop.permute.xlu0 %832
        %834 = vrot.lane.b32.xlu0 %v681, 20
        %v835 = vpop.permute.xlu0 %834
        %836 = vrot.lane.b32.xlu0 %v684, 20
        %v837 = vpop.permute.xlu0 %836
        %838 = vrot.lane.b32.xlu0 %v687, 20
        %v839 = vpop.permute.xlu0 %838
        %840 = vrot.lane.b32.xlu0 %v690, 20
        %v841 = vpop.permute.xlu0 %840
        %842 = vrot.lane.b32.xlu0 %v693, 20
        %v843 = vpop.permute.xlu0 %842
        %844 = vrot.lane.b32.xlu0 %v696, 20
        %v845 = vpop.permute.xlu0 %844
        %846 = vrot.lane.b32.xlu0 %v699, 20
        %v847 = vpop.permute.xlu0 %846
        %848 = vrot.lane.b32.xlu0 %v702, 20
        %v849 = vpop.permute.xlu0 %848
        %850 = vrot.lane.b32.xlu0 %v705, 20
        %v851 = vpop.permute.xlu0 %850
        %852 = vrot.lane.b32.xlu0 %v708, 20
        %v853 = vpop.permute.xlu0 %852
        %854 = vrot.lane.b32.xlu0 %v711, 20
        %v855 = vpop.permute.xlu0 %854
        %856 = vrot.lane.b32.xlu0 %v714, 20
        %v857 = vpop.permute.xlu0 %856
        %858 = vrot.lane.b32.xlu0 %v827, 20
        %v859 = vpop.permute.xlu0 %858
        %860 = vrot.lane.b32.xlu0 %v377, 24
        %v861 = vpop.permute.xlu0 %860
        %862 = vrot.lane.b32.xlu0 %v378, 24
        %v863 = vpop.permute.xlu0 %862
        %864 = vrot.lane.b32.xlu0 %v379, 24
        %v865 = vpop.permute.xlu0 %864
        %866 = vrot.lane.b32.xlu0 %v380, 24
        %v867 = vpop.permute.xlu0 %866
        %868 = vrot.lane.b32.xlu0 %v381, 24
        %v869 = vpop.permute.xlu0 %868
        %870 = vrot.lane.b32.xlu0 %v382, 24
        %v871 = vpop.permute.xlu0 %870
        %872 = vrot.lane.b32.xlu0 %v383, 24
        %v873 = vpop.permute.xlu0 %872
        %874 = vrot.lane.b32.xlu0 %v384, 24
        %v875 = vpop.permute.xlu0 %874
        %876 = vrot.lane.b32.xlu0 %v385, 24
        %v877 = vpop.permute.xlu0 %876
        %878 = vrot.lane.b32.xlu0 %v386, 24
        %v879 = vpop.permute.xlu0 %878
        %880 = vrot.lane.b32.xlu0 %v387, 24
        %v881 = vpop.permute.xlu0 %880
        %882 = vrot.lane.b32.xlu0 %v388, 24
        %v883 = vpop.permute.xlu0 %882
        %884 = vrot.lane.b32.xlu0 %v389, 24
        %v885 = vpop.permute.xlu0 %884
        %886 = vrot.lane.b32.xlu0 %v390, 24
        %v887 = vpop.permute.xlu0 %886
        %888 = vrot.lane.b32.xlu0 %v391, 24
        %v889 = vpop.permute.xlu0 %888
        %890 = vrot.lane.b32.xlu0 %v375, 24
        %v891 = vpop.permute.xlu0 %890
        %892 = vrot.lane.b32.xlu0 %v445, 28
        %v893 = vpop.permute.xlu0 %892
        %894 = vrot.lane.b32.xlu0 %v457, 28
        %v895 = vpop.permute.xlu0 %894
        %896 = vrot.lane.b32.xlu0 %v469, 28
        %v897 = vpop.permute.xlu0 %896
        %898 = vrot.lane.b32.xlu0 %v481, 28
        %v899 = vpop.permute.xlu0 %898
        %900 = vrot.lane.b32.xlu0 %v493, 28
        %v901 = vpop.permute.xlu0 %900
        %902 = vrot.lane.b32.xlu0 %v505, 28
        %v903 = vpop.permute.xlu0 %902
        %904 = vrot.lane.b32.xlu0 %v517, 28
        %v905 = vpop.permute.xlu0 %904
        %906 = vrot.lane.b32.xlu0 %v529, 28
        %v907 = vpop.permute.xlu0 %906
        %908 = vrot.lane.b32.xlu0 %v541, 28
        %v909 = vpop.permute.xlu0 %908
        %910 = vrot.lane.b32.xlu0 %v553, 28
        %v911 = vpop.permute.xlu0 %910
        %912 = vrot.lane.b32.xlu0 %v565, 28
        %v913 = vpop.permute.xlu0 %912
        %914 = vrot.lane.b32.xlu0 %v577, 28
        %v915 = vpop.permute.xlu0 %914
        %916 = vrot.lane.b32.xlu0 %v589, 28
        %v917 = vpop.permute.xlu0 %916
        %918 = vrot.lane.b32.xlu0 %v601, 28
        %v919 = vpop.permute.xlu0 %918
        %920 = vrot.lane.b32.xlu0 %v791, 28
        %v921 = vpop.permute.xlu0 %920
        %922 = vrot.lane.b32.xlu0 %v421, 28
        %v923 = vpop.permute.xlu0 %922
        %924 = vrot.lane.b32.xlu0 %v675, 32
        %v925 = vpop.permute.xlu0 %924
        %926 = vrot.lane.b32.xlu0 %v678, 32
        %v927 = vpop.permute.xlu0 %926
        %928 = vrot.lane.b32.xlu0 %v681, 32
        %v929 = vpop.permute.xlu0 %928
        %930 = vrot.lane.b32.xlu0 %v684, 32
        %v931 = vpop.permute.xlu0 %930
        %932 = vrot.lane.b32.xlu0 %v687, 32
        %v933 = vpop.permute.xlu0 %932
        %934 = vrot.lane.b32.xlu0 %v690, 32
        %v935 = vpop.permute.xlu0 %934
        %936 = vrot.lane.b32.xlu0 %v693, 32
        %v937 = vpop.permute.xlu0 %936
        %938 = vrot.lane.b32.xlu0 %v696, 32
        %v939 = vpop.permute.xlu0 %938
        %940 = vrot.lane.b32.xlu0 %v699, 32
        %v941 = vpop.permute.xlu0 %940
        %942 = vrot.lane.b32.xlu0 %v702, 32
        %v943 = vpop.permute.xlu0 %942
        %944 = vrot.lane.b32.xlu0 %v705, 32
        %v945 = vpop.permute.xlu0 %944
        %946 = vrot.lane.b32.xlu0 %v708, 32
        %v947 = vpop.permute.xlu0 %946
        %948 = vrot.lane.b32.xlu0 %v711, 32
        %v949 = vpop.permute.xlu0 %948
        %950 = vrot.lane.b32.xlu0 %v714, 32
        %v951 = vpop.permute.xlu0 %950
        %952 = vrot.lane.b32.xlu0 %v827, 32
        %v953 = vpop.permute.xlu0 %952
        %954 = vrot.lane.b32.xlu0 %v669, 32
        %v955 = vpop.permute.xlu0 %954
        %vm956 = vcmask 31744
        %v958 = vsel %vm956, %v375, %v603
        %v960 = vsel %vm956, %v376, %v605
        %v962 = vsel %vm956, %v377, %v607
        %v964 = vsel %vm956, %v378, %v609
        %v966 = vsel %vm956, %v379, %v611
        %v968 = vsel %vm956, %v380, %v613
        %v970 = vsel %vm956, %v381, %v615
        %v972 = vsel %vm956, %v382, %v617
        %v974 = vsel %vm956, %v383, %v619
        %v976 = vsel %vm956, %v384, %v621
        %v978 = vsel %vm956, %v385, %v623
        %v980 = vsel %vm956, %v386, %v625
        %v982 = vsel %vm956, %v387, %v627
        %v984 = vsel %vm956, %v388, %v629
        %v986 = vsel %vm956, %v389, %v631
        %v988 = vsel %vm956, %v390, %v633
        %vm989 = vcmask 64512
        %v991 = vsel %vm989, %v958, %v716
        %v993 = vsel %vm989, %v960, %v718
        %v995 = vsel %vm989, %v962, %v720
        %v997 = vsel %vm989, %v964, %v722
        %v999 = vsel %vm989, %v966, %v724
        %v1001 = vsel %vm989, %v968, %v726
        %v1003 = vsel %vm989, %v970, %v728
        %v1005 = vsel %vm989, %v972, %v730
        %v1007 = vsel %vm989, %v974, %v732
        %v1009 = vsel %vm989, %v976, %v734
        %v1011 = vsel %vm989, %v978, %v736
        %v1013 = vsel %vm989, %v980, %v738
        %v1015 = vsel %vm989, %v982, %v740
        %v1017 = vsel %vm989, %v984, %v742
        %v1019 = vsel %vm989, %v986, %v744
        %v1021 = vsel %vm989, %v988, %v746
        %vm1022 = vcmask 97280
        %v1024 = vsel %vm1022, %v991, %v749
        %v1026 = vsel %vm1022, %v993, %v751
        %v1028 = vsel %vm1022, %v995, %v753
        %v1030 = vsel %vm1022, %v997, %v755
        %v1032 = vsel %vm1022, %v999, %v757
        %v1034 = vsel %vm1022, %v1001, %v759
        %v1036 = vsel %vm1022, %v1003, %v761
        %v1038 = vsel %vm1022, %v1005, %v763
        %v1040 = vsel %vm1022, %v1007, %v765
        %v1042 = vsel %vm1022, %v1009, %v767
        %v1044 = vsel %vm1022, %v1011, %v769
        %v1046 = vsel %vm1022, %v1013, %v771
        %v1048 = vsel %vm1022, %v1015, %v773
        %v1050 = vsel %vm1022, %v1017, %v775
        %v1052 = vsel %vm1022, %v1019, %v777
        %v1054 = vsel %vm1022, %v1021, %v779
        %vm1055 = vcmask 130048
        %v1057 = vsel %vm1055, %v1024, %v793
        %v1059 = vsel %vm1055, %v1026, %v795
        %v1061 = vsel %vm1055, %v1028, %v797
        %v1063 = vsel %vm1055, %v1030, %v799
        %v1065 = vsel %vm1055, %v1032, %v801
        %v1067 = vsel %vm1055, %v1034, %v803
        %v1069 = vsel %vm1055, %v1036, %v805
        %v1071 = vsel %vm1055, %v1038, %v807
        %v1073 = vsel %vm1055, %v1040, %v809
        %v1075 = vsel %vm1055, %v1042, %v811
        %v1077 = vsel %vm1055, %v1044, %v813
        %v1079 = vsel %vm1055, %v1046, %v815
        %v1081 = vsel %vm1055, %v1048, %v817
        %v1083 = vsel %vm1055, %v1050, %v819
        %v1085 = vsel %vm1055, %v1052, %v821
        %v1087 = vsel %vm1055, %v1054, %v823
        %vm1088 = vcmask 162816
        %v1090 = vsel %vm1088, %v1057, %v829
        %v1092 = vsel %vm1088, %v1059, %v831
        %v1094 = vsel %vm1088, %v1061, %v833
        %v1096 = vsel %vm1088, %v1063, %v835
        %v1098 = vsel %vm1088, %v1065, %v837
        %v1100 = vsel %vm1088, %v1067, %v839
        %v1102 = vsel %vm1088, %v1069, %v841
        %v1104 = vsel %vm1088, %v1071, %v843
        %v1106 = vsel %vm1088, %v1073, %v845
        %v1108 = vsel %vm1088, %v1075, %v847
        %v1110 = vsel %vm1088, %v1077, %v849
        %v1112 = vsel %vm1088, %v1079, %v851
        %v1114 = vsel %vm1088, %v1081, %v853
        %v1116 = vsel %vm1088, %v1083, %v855
        %v1118 = vsel %vm1088, %v1085, %v857
        %v1120 = vsel %vm1088, %v1087, %v859
        %vm1121 = vcmask 195584
        %v1123 = vsel %vm1121, %v1090, %v861
        %v1125 = vsel %vm1121, %v1092, %v863
        %v1127 = vsel %vm1121, %v1094, %v865
        %v1129 = vsel %vm1121, %v1096, %v867
        %v1131 = vsel %vm1121, %v1098, %v869
        %v1133 = vsel %vm1121, %v1100, %v871
        %v1135 = vsel %vm1121, %v1102, %v873
        %v1137 = vsel %vm1121, %v1104, %v875
        %v1139 = vsel %vm1121, %v1106, %v877
        %v1141 = vsel %vm1121, %v1108, %v879
        %v1143 = vsel %vm1121, %v1110, %v881
        %v1145 = vsel %vm1121, %v1112, %v883
        %v1147 = vsel %vm1121, %v1114, %v885
        %v1149 = vsel %vm1121, %v1116, %v887
        %v1151 = vsel %vm1121, %v1118, %v889
        %v1153 = vsel %vm1121, %v1120, %v891
        %vm1154 = vcmask 228352
        %v1156 = vsel %vm1154, %v1123, %v893
        %v1158 = vsel %vm1154, %v1125, %v895
        %v1160 = vsel %vm1154, %v1127, %v897
        %v1162 = vsel %vm1154, %v1129, %v899
        %v1164 = vsel %vm1154, %v1131, %v901
        %v1166 = vsel %vm1154, %v1133, %v903
        %v1168 = vsel %vm1154, %v1135, %v905
        %v1170 = vsel %vm1154, %v1137, %v907
        %v1172 = vsel %vm1154, %v1139, %v909
        %v1174 = vsel %vm1154, %v1141, %v911
        %v1176 = vsel %vm1154, %v1143, %v913
        %v1178 = vsel %vm1154, %v1145, %v915
        %v1180 = vsel %vm1154, %v1147, %v917
        %v1182 = vsel %vm1154, %v1149, %v919
        %v1184 = vsel %vm1154, %v1151, %v921
        %v1186 = vsel %vm1154, %v1153, %v923
        %vm1187 = vcmask 261120
        %v1189 = vsel %vm1187, %v1156, %v925
        %v1191 = vsel %vm1187, %v1158, %v927
        %v1193 = vsel %vm1187, %v1160, %v929
        %v1195 = vsel %vm1187, %v1162, %v931
        %v1197 = vsel %vm1187, %v1164, %v933
        %v1199 = vsel %vm1187, %v1166, %v935
        %v1201 = vsel %vm1187, %v1168, %v937
        %v1203 = vsel %vm1187, %v1170, %v939
        %v1205 = vsel %vm1187, %v1172, %v941
        %v1207 = vsel %vm1187, %v1174, %v943
        %v1209 = vsel %vm1187, %v1176, %v945
        %v1211 = vsel %vm1187, %v1178, %v947
        %v1213 = vsel %vm1187, %v1180, %v949
        %v1215 = vsel %vm1187, %v1182, %v951
        %v1217 = vsel %vm1187, %v1184, %v953
        %v1219 = vsel %vm1187, %v1186, %v955
        %v1220 = vld [vmem:[%s1] sm:$0xf]
        %v1221 = vld [vmem:[%s1 + $0x4] sm:$0xf]
        %v1222 = vld [vmem:[%s1 + $0x8] sm:$0xf]
        %v1223 = vld [vmem:[%s1 + $0xc] sm:$0xf]
        %v1224 = vld [vmem:[%s1 + $0x10] sm:$0x3]
        %v1230 = vunpack.c.l.b16 %v1220
        %v1231 = vunpack.c.l.b16 %v1221
        %v1232 = vunpack.c.l.b16 %v1222
        %v1233 = vunpack.c.l.b16 %v1223
        %v1234 = vunpack.c.l.b16 %v1224
        %v1235 = vpack.c.b16 %v1231, %v1230
        %v1236 = vpack.c.b16 %v1233, %v1232
        %v1237 = vpack.c.b16 %v1234, %v1234
        %vm1240 = vcmask 293888
        %v1241 = vsel %vm1240, %v1189, 0
        %v1243 = vsel %vm1240, %v1191, 0
        %v1245 = vsel %vm1240, %v1193, 0
        %v1247 = vsel %vm1240, %v1195, 0
        %v1249 = vsel %vm1240, %v1197, 0
        %v1251 = vsel %vm1240, %v1199, 0
        %v1253 = vsel %vm1240, %v1201, 0
        %v1255 = vsel %vm1240, %v1203, 0
        %v1257 = vsel %vm1240, %v1205, 0
        %v1259 = vsel %vm1240, %v1207, 0
        %v1261 = vsel %vm1240, %v1209, 0
        %v1263 = vsel %vm1240, %v1211, 0
        %v1265 = vsel %vm1240, %v1213, 0
        %v1267 = vsel %vm1240, %v1215, 0
        %v1269 = vsel %vm1240, %v1217, 0
        %v1271 = vsel %vm1240, %v1219, 0
        %vm1273 = vcmask 1041408
        %v1275 = vsel %vm1273, %v1237, 0
        %1277 = vmatprep.subr.bf16.mxu0 0
        %1278 = vmatpush1.bf16.msra.mxu0 %v1235
        %1279 = vmatprep.subr.bf16.mxu0 0
        %1280 = vmatpush1.bf16.msra.mxu0 %v1236
        %1281 = vmatprep.subr.bf16.mxu0 0
        %1282 = vmatpush1.bf16.msra.mxu0 %v1275
        %1283 = vmatprep.subr.bf16.mxu0 0
        %1284 = vmatpush1.bf16.msra.mxu0 0
        %1285 = vmatprep.subr.bf16.mxu0 0
        %1286 = vmatpush1.bf16.msra.mxu0 0
        %1287 = vmatprep.subr.bf16.mxu0 0
        %1288 = vmatpush1.bf16.msra.mxu0 0
        %1289 = vmatprep.subr.bf16.mxu0 0
        %1290 = vmatpush1.bf16.msra.mxu0 0
        %1291 = vmatprep.subr.bf16.mxu0 0
        %1292 = vmatpush1.bf16.msra.mxu0 0
        %1293 = vmatprep.subr.bf16.mxu0 0
        %1294 = vmatpush1.bf16.msra.mxu0 0
        %1295 = vmatprep.subr.bf16.mxu0 0
        %1296 = vmatpush1.bf16.msra.mxu0 0
        %1297 = vmatprep.subr.bf16.mxu0 0
        %1298 = vmatpush1.bf16.msra.mxu0 0
        %1299 = vmatprep.subr.bf16.mxu0 0
        %1300 = vmatpush1.bf16.msra.mxu0 0
        %1301 = vmatprep.subr.bf16.mxu0 0
        %1302 = vmatpush1.bf16.msra.mxu0 0
        %1303 = vmatprep.subr.bf16.mxu0 0
        %1304 = vmatpush1.bf16.msra.mxu0 0
        %1305 = vmatprep.subr.bf16.mxu0 0
        %1306 = vmatpush1.bf16.msra.mxu0 0
        %1307 = vmatprep.subr.bf16.mxu0 0
        %1308 = vmatpush1.bf16.msra.mxu0 0
        %1309 = vmatprep.mubr.bf16.mxu0 0
        %1310 = vmatmul.mubr.bf16.gmra.mrb[0].mxu0 %v1241
        %v1311 = vpop.f32.mrb[0].mxu0
        %v1312 = vadd.f32 0.0, %v1311
        %v1313 = vpop.f32.mrb[0].mxu0
        %v1314 = vpop.f32.mrb[0].mxu0
        %v1315 = vadd.f32 0.0, %v1314
        %v1316 = vpop.f32.mrb[0].mxu0
        %1317 = vmatprep.mubr.bf16.mxu0 0
        %1318 = vmatmul.mubr.bf16.gmra.mrb[0].mxu0 %v1243
        %v1319 = vpop.f32.mrb[0].mxu0
        %v1320 = vadd.f32 0.0, %v1319
        %v1321 = vpop.f32.mrb[0].mxu0
        %v1322 = vpop.f32.mrb[0].mxu0
        %v1323 = vadd.f32 0.0, %v1322
        %v1324 = vpop.f32.mrb[0].mxu0
        %1325 = vmatprep.mubr.bf16.mxu0 0
        %1326 = vmatmul.mubr.bf16.gmra.mrb[0].mxu0 %v1245
        %v1327 = vpop.f32.mrb[0].mxu0
        %v1328 = vadd.f32 0.0, %v1327
        %v1329 = vpop.f32.mrb[0].mxu0
        %v1330 = vpop.f32.mrb[0].mxu0
        %v1331 = vadd.f32 0.0, %v1330
        %v1332 = vpop.f32.mrb[0].mxu0
        %1333 = vmatprep.mubr.bf16.mxu0 0
        %1334 = vmatmul.mubr.bf16.gmra.mrb[0].mxu0 %v1247
        %v1335 = vpop.f32.mrb[0].mxu0
        %v1336 = vadd.f32 0.0, %v1335
        %v1337 = vpop.f32.mrb[0].mxu0
        %v1338 = vpop.f32.mrb[0].mxu0
        %v1339 = vadd.f32 0.0, %v1338
        %v1340 = vpop.f32.mrb[0].mxu0
        %1341 = vmatprep.mubr.bf16.mxu0 0
        %1342 = vmatmul.mubr.bf16.gmra.mrb[0].mxu0 %v1249
        %v1343 = vpop.f32.mrb[0].mxu0
        %v1344 = vadd.f32 0.0, %v1343
        %v1345 = vpop.f32.mrb[0].mxu0
        %v1346 = vpop.f32.mrb[0].mxu0
        %v1347 = vadd.f32 0.0, %v1346
        %v1348 = vpop.f32.mrb[0].mxu0
        %1349 = vmatprep.mubr.bf16.mxu0 0
        %1350 = vmatmul.mubr.bf16.gmra.mrb[0].mxu0 %v1251
        %v1351 = vpop.f32.mrb[0].mxu0
        %v1352 = vadd.f32 0.0, %v1351
        %v1353 = vpop.f32.mrb[0].mxu0
        %v1354 = vpop.f32.mrb[0].mxu0
        %v1355 = vadd.f32 0.0, %v1354
        %v1356 = vpop.f32.mrb[0].mxu0
        %1357 = vmatprep.mubr.bf16.mxu0 0
        %1358 = vmatmul.mubr.bf16.gmra.mrb[0].mxu0 %v1253
        %v1359 = vpop.f32.mrb[0].mxu0
        %v1360 = vadd.f32 0.0, %v1359
        %v1361 = vpop.f32.mrb[0].mxu0
        %v1362 = vpop.f32.mrb[0].mxu0
        %v1363 = vadd.f32 0.0, %v1362
        %v1364 = vpop.f32.mrb[0].mxu0
        %1365 = vmatprep.mubr.bf16.mxu0 0
        %1366 = vmatmul.mubr.bf16.gmra.mrb[0].mxu0 %v1255
        %v1367 = vpop.f32.mrb[0].mxu0
        %v1368 = vadd.f32 0.0, %v1367
        %v1369 = vpop.f32.mrb[0].mxu0
        %v1370 = vpop.f32.mrb[0].mxu0
        %v1371 = vadd.f32 0.0, %v1370
        %v1372 = vpop.f32.mrb[0].mxu0
        %1373 = vmatprep.mubr.bf16.mxu0 0
        %1374 = vmatmul.mubr.bf16.gmra.mrb[0].mxu0 %v1257
        %v1375 = vpop.f32.mrb[0].mxu0
        %v1376 = vadd.f32 0.0, %v1375
        %v1377 = vpop.f32.mrb[0].mxu0
        %v1378 = vpop.f32.mrb[0].mxu0
        %v1379 = vadd.f32 0.0, %v1378
        %v1380 = vpop.f32.mrb[0].mxu0
        %1381 = vmatprep.mubr.bf16.mxu0 0
        %1382 = vmatmul.mubr.bf16.gmra.mrb[0].mxu0 %v1259
        %v1383 = vpop.f32.mrb[0].mxu0
        %v1384 = vadd.f32 0.0, %v1383
        %v1385 = vpop.f32.mrb[0].mxu0
        %v1386 = vpop.f32.mrb[0].mxu0
        %v1387 = vadd.f32 0.0, %v1386
        %v1388 = vpop.f32.mrb[0].mxu0
        %1389 = vmatprep.mubr.bf16.mxu0 0
        %1390 = vmatmul.mubr.bf16.gmra.mrb[0].mxu0 %v1261
        %v1391 = vpop.f32.mrb[0].mxu0
        %v1392 = vadd.f32 0.0, %v1391
        %v1393 = vpop.f32.mrb[0].mxu0
        %v1394 = vpop.f32.mrb[0].mxu0
        %v1395 = vadd.f32 0.0, %v1394
        %v1396 = vpop.f32.mrb[0].mxu0
        %1397 = vmatprep.mubr.bf16.mxu0 0
        %1398 = vmatmul.mubr.bf16.gmra.mrb[0].mxu0 %v1263
        %v1399 = vpop.f32.mrb[0].mxu0
        %v1400 = vadd.f32 0.0, %v1399
        %v1401 = vpop.f32.mrb[0].mxu0
        %v1402 = vpop.f32.mrb[0].mxu0
        %v1403 = vadd.f32 0.0, %v1402
        %v1404 = vpop.f32.mrb[0].mxu0
        %1405 = vmatprep.mubr.bf16.mxu0 0
        %1406 = vmatmul.mubr.bf16.gmra.mrb[0].mxu0 %v1265
        %v1407 = vpop.f32.mrb[0].mxu0
        %v1408 = vadd.f32 0.0, %v1407
        %v1409 = vpop.f32.mrb[0].mxu0
        %v1410 = vpop.f32.mrb[0].mxu0
        %v1411 = vadd.f32 0.0, %v1410
        %v1412 = vpop.f32.mrb[0].mxu0
        %1413 = vmatprep.mubr.bf16.mxu0 0
        %1414 = vmatmul.mubr.bf16.gmra.mrb[0].mxu0 %v1267
        %v1415 = vpop.f32.mrb[0].mxu0
        %v1416 = vadd.f32 0.0, %v1415
        %v1417 = vpop.f32.mrb[0].mxu0
        %v1418 = vpop.f32.mrb[0].mxu0
        %v1419 = vadd.f32 0.0, %v1418
        %v1420 = vpop.f32.mrb[0].mxu0
        %1421 = vmatprep.mubr.bf16.mxu0 0
        %1422 = vmatmul.mubr.bf16.gmra.mrb[0].mxu0 %v1269
        %v1423 = vpop.f32.mrb[0].mxu0
        %v1424 = vadd.f32 0.0, %v1423
        %v1425 = vpop.f32.mrb[0].mxu0
        %v1426 = vpop.f32.mrb[0].mxu0
        %v1427 = vadd.f32 0.0, %v1426
        %v1428 = vpop.f32.mrb[0].mxu0
        %1429 = vmatprep.mubr.bf16.mxu0 0
        %1430 = vmatmul.mubr.bf16.gmra.mrb[0].mxu0 %v1271
        %v1431 = vpop.f32.mrb[0].mxu0
        %v1432 = vadd.f32 0.0, %v1431
        %v1433 = vpop.f32.mrb[0].mxu0
        %v1434 = vpop.f32.mrb[0].mxu0
        %v1435 = vadd.f32 0.0, %v1434
        %v1436 = vpop.f32.mrb[0].mxu0
        %1437 = vdwg.mxu0
        %1438 = vst.msk [vmem:[%s169] sm:$0xff] %vm989, %v1312
        %1439 = vst.msk [vmem:[%s169 + $0x8] sm:$0xff] %vm989, %v1315
        %1440 = vst.msk [vmem:[%s169 + $0x10] sm:$0xff] %vm989, %v1320
        %1441 = vst.msk [vmem:[%s169 + $0x18] sm:$0xff] %vm989, %v1323
        %1442 = vst.msk [vmem:[%s169 + $0x20] sm:$0xff] %vm989, %v1328
        %1443 = vst.msk [vmem:[%s169 + $0x28] sm:$0xff] %vm989, %v1331
        %1444 = vst.msk [vmem:[%s169 + $0x30] sm:$0xff] %vm989, %v1336
        %1445 = vst.msk [vmem:[%s169 + $0x38] sm:$0xff] %vm989, %v1339
        %1446 = vst.msk [vmem:[%s169 + $0x40] sm:$0xff] %vm989, %v1344
        %1447 = vst.msk [vmem:[%s169 + $0x48] sm:$0xff] %vm989, %v1347
        %1448 = vst.msk [vmem:[%s169 + $0x50] sm:$0xff] %vm989, %v1352
        %1449 = vst.msk [vmem:[%s169 + $0x58] sm:$0xff] %vm989, %v1355
        %1450 = vst.msk [vmem:[%s169 + $0x60] sm:$0xff] %vm989, %v1360
        %1451 = vst.msk [vmem:[%s169 + $0x68] sm:$0xff] %vm989, %v1363
        %1452 = vst.msk [vmem:[%s169 + $0x70] sm:$0xff] %vm989, %v1368
        %1453 = vst.msk [vmem:[%s169 + $0x78] sm:$0xff] %vm989, %v1371
        %1454 = vst.msk [vmem:[%s169 + $0x80] sm:$0xff] %vm989, %v1376
        %1455 = vst.msk [vmem:[%s169 + $0x88] sm:$0xff] %vm989, %v1379
        %1456 = vst.msk [vmem:[%s169 + $0x90] sm:$0xff] %vm989, %v1384
        %1457 = vst.msk [vmem:[%s169 + $0x98] sm:$0xff] %vm989, %v1387
        %1458 = vst.msk [vmem:[%s169 + $0xa0] sm:$0xff] %vm989, %v1392
        %1459 = vst.msk [vmem:[%s169 + $0xa8] sm:$0xff] %vm989, %v1395
        %1460 = vst.msk [vmem:[%s169 + $0xb0] sm:$0xff] %vm989, %v1400
        %1461 = vst.msk [vmem:[%s169 + $0xb8] sm:$0xff] %vm989, %v1403
        %1462 = vst.msk [vmem:[%s169 + $0xc0] sm:$0xff] %vm989, %v1408
        %1463 = vst.msk [vmem:[%s169 + $0xc8] sm:$0xff] %vm989, %v1411
        %1464 = vst.msk [vmem:[%s169 + $0xd0] sm:$0xff] %vm989, %v1416
        %1465 = vst.msk [vmem:[%s169 + $0xd8] sm:$0xff] %vm989, %v1419
        %1466 = vst.msk [vmem:[%s169 + $0xe0] sm:$0xff] %vm989, %v1424
        %1467 = vst.msk [vmem:[%s169 + $0xe8] sm:$0xff] %vm989, %v1427
        %1468 = vst.msk [vmem:[%s169 + $0xf0] sm:$0xff] %vm989, %v1432
        %1469 = vst.msk [vmem:[%s169 + $0xf8] sm:$0xff] %vm989, %v1435
        %v1470 = vsel %vm989, %v1312, 0.0
        %v1471 = vsel %vm989, %v1315, 0.0
        %v1472 = vadd.f32 %v1470, %v1471
        %v1473 = vsel %vm989, %v1320, 0.0
        %v1474 = vadd.f32 %v1472, %v1473
        %v1475 = vsel %vm989, %v1323, 0.0
        %v1476 = vadd.f32 %v1474, %v1475
        %v1477 = vsel %vm989, %v1328, 0.0
        %v1478 = vadd.f32 %v1476, %v1477
        %v1479 = vsel %vm989, %v1331, 0.0
        %v1480 = vadd.f32 %v1478, %v1479
        %v1481 = vsel %vm989, %v1336, 0.0
        %v1482 = vadd.f32 %v1480, %v1481
        %v1483 = vsel %vm989, %v1339, 0.0
        %v1484 = vadd.f32 %v1482, %v1483
        %v1485 = vsel %vm989, %v1344, 0.0
        %v1486 = vadd.f32 %v1484, %v1485
        %v1487 = vsel %vm989, %v1347, 0.0
        %v1488 = vadd.f32 %v1486, %v1487
        %v1489 = vsel %vm989, %v1352, 0.0
        %v1490 = vadd.f32 %v1488, %v1489
        %v1491 = vsel %vm989, %v1355, 0.0
        %v1492 = vadd.f32 %v1490, %v1491
        %v1493 = vsel %vm989, %v1360, 0.0
        %v1494 = vadd.f32 %v1492, %v1493
        %v1495 = vsel %vm989, %v1363, 0.0
        %v1496 = vadd.f32 %v1494, %v1495
        %v1497 = vsel %vm989, %v1368, 0.0
        %v1498 = vadd.f32 %v1496, %v1497
        %v1499 = vsel %vm989, %v1371, 0.0
        %v1500 = vadd.f32 %v1498, %v1499
        %v1501 = vsel %vm989, %v1376, 0.0
        %v1502 = vadd.f32 %v1500, %v1501
        %v1503 = vsel %vm989, %v1379, 0.0
        %v1504 = vadd.f32 %v1502, %v1503
        %v1505 = vsel %vm989, %v1384, 0.0
        %v1506 = vadd.f32 %v1504, %v1505
        %v1507 = vsel %vm989, %v1387, 0.0
        %v1508 = vadd.f32 %v1506, %v1507
        %v1509 = vsel %vm989, %v1392, 0.0
        %v1510 = vadd.f32 %v1508, %v1509
        %v1511 = vsel %vm989, %v1395, 0.0
        %v1512 = vadd.f32 %v1510, %v1511
        %v1513 = vsel %vm989, %v1400, 0.0
        %v1514 = vadd.f32 %v1512, %v1513
        %v1515 = vsel %vm989, %v1403, 0.0
        %v1516 = vadd.f32 %v1514, %v1515
        %v1517 = vsel %vm989, %v1408, 0.0
        %v1518 = vadd.f32 %v1516, %v1517
        %v1519 = vsel %vm989, %v1411, 0.0
        %v1520 = vadd.f32 %v1518, %v1519
        %v1521 = vsel %vm989, %v1416, 0.0
        %v1522 = vadd.f32 %v1520, %v1521
        %v1523 = vsel %vm989, %v1419, 0.0
        %v1524 = vadd.f32 %v1522, %v1523
        %v1525 = vsel %vm989, %v1424, 0.0
        %v1526 = vadd.f32 %v1524, %v1525
        %v1527 = vsel %vm989, %v1427, 0.0
        %v1528 = vadd.f32 %v1526, %v1527
        %v1529 = vsel %vm989, %v1432, 0.0
        %v1530 = vadd.f32 %v1528, %v1529
        %v1531 = vsel %vm989, %v1435, 0.0
        %v1532 = vadd.f32 %v1530, %v1531
        %v1533 = vrot.slane %v1532, 4
        %v1534 = vadd.f32 %v1532, %v1533
        %v1535 = vrot.slane %v1534, 2
        %v1536 = vadd.f32 %v1534, %v1535
        %v1537 = vrot.slane %v1536, 1
        %v1538 = vadd.f32 %v1536, %v1537
        %v1539 = vmul.f32 %v1312, %v1312
        %v1540 = vmul.f32 %v1315, %v1315
        %v1541 = vmul.f32 %v1320, %v1320
        %v1542 = vmul.f32 %v1323, %v1323
        %v1543 = vmul.f32 %v1328, %v1328
        %v1544 = vmul.f32 %v1331, %v1331
        %v1545 = vmul.f32 %v1336, %v1336
        %v1546 = vmul.f32 %v1339, %v1339
        %v1547 = vmul.f32 %v1344, %v1344
        %v1548 = vmul.f32 %v1347, %v1347
        %v1549 = vmul.f32 %v1352, %v1352
        %v1550 = vmul.f32 %v1355, %v1355
        %v1551 = vmul.f32 %v1360, %v1360
        %v1552 = vmul.f32 %v1363, %v1363
        %v1553 = vmul.f32 %v1368, %v1368
        %v1554 = vmul.f32 %v1371, %v1371
        %v1555 = vmul.f32 %v1376, %v1376
        %v1556 = vmul.f32 %v1379, %v1379
        %v1557 = vmul.f32 %v1384, %v1384
        %v1558 = vmul.f32 %v1387, %v1387
        %v1559 = vmul.f32 %v1392, %v1392
        %v1560 = vmul.f32 %v1395, %v1395
        %v1561 = vmul.f32 %v1400, %v1400
        %v1562 = vmul.f32 %v1403, %v1403
        %v1563 = vmul.f32 %v1408, %v1408
        %v1564 = vmul.f32 %v1411, %v1411
        %v1565 = vmul.f32 %v1416, %v1416
        %v1566 = vmul.f32 %v1419, %v1419
        %v1567 = vmul.f32 %v1424, %v1424
        %v1568 = vmul.f32 %v1427, %v1427
        %v1569 = vmul.f32 %v1432, %v1432
        %v1570 = vmul.f32 %v1435, %v1435
        %v1571 = vsel %vm989, %v1539, 0.0
        %v1572 = vsel %vm989, %v1540, 0.0
        %v1573 = vadd.f32 %v1571, %v1572
        %v1574 = vsel %vm989, %v1541, 0.0
        %v1575 = vadd.f32 %v1573, %v1574
        %v1576 = vsel %vm989, %v1542, 0.0
        %v1577 = vadd.f32 %v1575, %v1576
        %v1578 = vsel %vm989, %v1543, 0.0
        %v1579 = vadd.f32 %v1577, %v1578
        %v1580 = vsel %vm989, %v1544, 0.0
        %v1581 = vadd.f32 %v1579, %v1580
        %v1582 = vsel %vm989, %v1545, 0.0
        %v1583 = vadd.f32 %v1581, %v1582
        %v1584 = vsel %vm989, %v1546, 0.0
        %v1585 = vadd.f32 %v1583, %v1584
        %v1586 = vsel %vm989, %v1547, 0.0
        %v1587 = vadd.f32 %v1585, %v1586
        %v1588 = vsel %vm989, %v1548, 0.0
        %v1589 = vadd.f32 %v1587, %v1588
        %v1590 = vsel %vm989, %v1549, 0.0
        %v1591 = vadd.f32 %v1589, %v1590
        %v1592 = vsel %vm989, %v1550, 0.0
        %v1593 = vadd.f32 %v1591, %v1592
        %v1594 = vsel %vm989, %v1551, 0.0
        %v1595 = vadd.f32 %v1593, %v1594
        %v1596 = vsel %vm989, %v1552, 0.0
        %v1597 = vadd.f32 %v1595, %v1596
        %v1598 = vsel %vm989, %v1553, 0.0
        %v1599 = vadd.f32 %v1597, %v1598
        %v1600 = vsel %vm989, %v1554, 0.0
        %v1601 = vadd.f32 %v1599, %v1600
        %v1602 = vsel %vm989, %v1555, 0.0
        %v1603 = vadd.f32 %v1601, %v1602
        %v1604 = vsel %vm989, %v1556, 0.0
        %v1605 = vadd.f32 %v1603, %v1604
        %v1606 = vsel %vm989, %v1557, 0.0
        %v1607 = vadd.f32 %v1605, %v1606
        %v1608 = vsel %vm989, %v1558, 0.0
        %v1609 = vadd.f32 %v1607, %v1608
        %v1610 = vsel %vm989, %v1559, 0.0
        %v1611 = vadd.f32 %v1609, %v1610
        %v1612 = vsel %vm989, %v1560, 0.0
        %v1613 = vadd.f32 %v1611, %v1612
        %v1614 = vsel %vm989, %v1561, 0.0
        %v1615 = vadd.f32 %v1613, %v1614
        %v1616 = vsel %vm989, %v1562, 0.0
        %v1617 = vadd.f32 %v1615, %v1616
        %v1618 = vsel %vm989, %v1563, 0.0
        %v1619 = vadd.f32 %v1617, %v1618
        %v1620 = vsel %vm989, %v1564, 0.0
        %v1621 = vadd.f32 %v1619, %v1620
        %v1622 = vsel %vm989, %v1565, 0.0
        %v1623 = vadd.f32 %v1621, %v1622
        %v1624 = vsel %vm989, %v1566, 0.0
        %v1625 = vadd.f32 %v1623, %v1624
        %v1626 = vsel %vm989, %v1567, 0.0
        %v1627 = vadd.f32 %v1625, %v1626
        %v1628 = vsel %vm989, %v1568, 0.0
        %v1629 = vadd.f32 %v1627, %v1628
        %v1630 = vsel %vm989, %v1569, 0.0
        %v1631 = vadd.f32 %v1629, %v1630
        %v1632 = vsel %vm989, %v1570, 0.0
        %v1633 = vadd.f32 %v1631, %v1632
        %v1634 = vrot.slane %v1633, 4
        %v1635 = vadd.f32 %v1633, %v1634
        %v1636 = vrot.slane %v1635, 2
        %v1637 = vadd.f32 %v1635, %v1636
        %v1638 = vrot.slane %v1637, 1
        %v1639 = vadd.f32 %v1637, %v1638
        %p1640 = scmp.eq.s32.totalorder %s16, 0
        // Predicated region
        $region29: #{tpu_custom_call.1} parent=27 // pred_check
          %p1641 = pneg %p1640
        $region30: #{tpu_custom_call.1} parent=27 // pred_check_branch
          %1643 = sbr.rel (%p1641) target = $region32
        $region31: #{tpu_custom_call.1} parent=27 // pred_region
          %vm1644 = vcmask 58368
          %1645 = vst.msk [vmem:[#allocation2] sm:$0x3] %vm1644, 0.0
        $region32: #{tpu_custom_call.1} parent=27 // pred_fallthru
          _
        %v1646 = vld [vmem:[#allocation2] sm:$0x3]
        %vm1647 = vcmask 1040384
        %v1648 = vsel %vm1647, %v1538, %v1639
        %v1649 = vadd.f32 %v1646, %v1648
        %vm1650 = vcmask 58368
        %1651 = vst.msk [vmem:[#allocation2] sm:$0x3] %vm1650, %v1649
        %p1652 = scmp.lt.s32.totalorder %s16, 1
        %s1653 = scalar_select %p1652, %s16, 1
        %s1654 = smul.addr %s1653, 32
        %s1655 = smul.addr %s1654, 8
        %s1656 = scalar_lea.vmem %s2, %s1655
        // Predicated region
        $region33: #{tpu_custom_call.1} parent=27 // pred_check
          %p1657 = pneg %p81
        $region34: #{tpu_custom_call.1} parent=27 // pred_check_branch
          %1659 = sbr.rel (%p1657) target = $region36
        $region35: #{tpu_custom_call.1} parent=27 // pred_region
          _
        $region36: #{tpu_custom_call.1} parent=27 // pred_fallthru
          _
        // Predicated region
        $region37: #{tpu_custom_call.1} parent=27 // pred_check
          %p1660 = pneg %p102
        $region38: #{tpu_custom_call.1} parent=27 // pred_check_branch
          %1662 = sbr.rel (%p1660) target = $region40
        $region39: #{tpu_custom_call.1} parent=27 // pred_region
          %s1664 = ssub.s32 32, 32
          %1665 = vsyncadd [#allocation3], %s1664
          %s1667 = sshll.u32 [#allocation2], 4
          %s1668 = int_to_ptr.vmem [resolvable:$true] %s1667
          %1670 = dma.vmem_to_hbm [thread:$0]  %s1668, 32, %s3, [#allocation3]
        $region40: #{tpu_custom_call.1} parent=27 // pred_fallthru
          _
        // Predicated region
        $region41: #{tpu_custom_call.1} parent=27 // pred_check
          %p1671 = pneg %p102
        $region42: #{tpu_custom_call.1} parent=27 // pred_check_branch
          %1673 = sbr.rel (%p1671) target = $region44
        $region43: #{tpu_custom_call.1} parent=27 // pred_region
          %1674 = dma.done [#allocation3], 32
        $region44: #{tpu_custom_call.1} parent=27 // pred_fallthru
          _
      $region28: #{tpu_custom_call.1} parent=5 // pred_fallthru
        _
      %p1675 = scmp.le.s32.totalorder 2, %s11
      // Predicated region
      $region45: #{tpu_custom_call.1} parent=5 // pred_check
        %p1676 = pneg %p1675
      $region46: #{tpu_custom_call.1} parent=5 // pred_check_branch
        %1678 = sbr.rel (%p1676) target = $region48
      $region47: #{tpu_custom_call.1} parent=5 // pred_region
        %s1679 = ssub.s32 %s11, 2
        // Predicated region
        $region49: #{tpu_custom_call.1} parent=47 // pred_check
          %p1680 = pneg %p87
        $region50: #{tpu_custom_call.1} parent=47 // pred_check_branch
          %1682 = sbr.rel (%p1680) target = $region52
        $region51: #{tpu_custom_call.1} parent=47 // pred_region
          %p1683 = scmp.lt.s32.totalorder %s17, 1
          %s1684 = scalar_select %p1683, %s17, 1
          %s1685 = smul.addr %s1684, 32
          %s1686 = smul.addr %s1685, 8
          %s1687 = scalar_lea.vmem %s2, %s1686
        $region52: #{tpu_custom_call.1} parent=47 // pred_fallthru
          _
      $region48: #{tpu_custom_call.1} parent=5 // pred_fallthru
        _
    $region6: #{tpu_custom_call.1} parent=1 // loop_footer
      %s15 = sadd.s32 1, %s11
    $region7: #{tpu_custom_call.1} parent=1 // loop_footer_branch
      %10 = sbr.rel target = $region3
    $region8: #{tpu_custom_call.1} parent=1 // loop_exit
      _
    %1688 = vsyncpa [#allocation3], 1
    %s1689 = scalar_lea.sflag [#allocation3], 1
    %1690 = vsyncpa %s1689, 1

</llo_original>
